<compile_context>
chip_gen: v7x
topology: tpu7x:2x2x1
jax: 0.10.0
libtpu: 0.0.40
codegen_flags: <defaults>
</compile_context>

<pallas_src>
import functools

import jax
import jax.numpy as jnp
import numpy as np
from jax.experimental import pallas as pl
from jax.experimental.pallas import tpu as pltpu

EPS = 1e-9


def _round_up(x: int, m: int) -> int:
    return ((x + m - 1) // m) * m


def _vmem_limit_bytes() -> int:
    """Generation-aware scoped-VMEM budget (kernel footprint itself is tiny)."""
    try:
        cap = int(pltpu.get_tpu_info().vmem_capacity_bytes)
    except Exception:
        cap = 64 * 1024 * 1024
    return max(16 * 1024 * 1024, min(cap // 2, 96 * 1024 * 1024))


def _edge_encoding_kernel(scores_ref, paths_ref, out_ref, *,
                          num_edges: int, num_chunks: int, chunk: int,
                          max_path_distance: int, unroll_chunks: bool):
    # scores_ref: (L, E_pad) f32   scores[l, e] = <emb[b, e, :], vec[l, :]>
    # paths_ref:  (L, T)     int32 (node-pair axis lane-dense)
    # out_ref:    (1, T)     f32
    L = max_path_distance
    paths = paths_ref[...]                                   # (L, T)
    T = paths.shape[1]

    # Valid-hop count per node pair (explicit bounds check against the *real* E,
    # matching the reference; padded NN columns hold -1 -> count 0).
    valid = jnp.logical_and(paths >= 0, paths < num_edges)   # (L, T) bool
    cnt = jnp.sum(valid.astype(jnp.float32), axis=0, keepdims=True)   # (1, T)

    # Small chunked iota (chunk rows on sublanes), built once per tile.
    base_iota = jax.lax.broadcasted_iota(jnp.int32, (chunk, T), 0)

    def accum_chunk(acc, e0):
        # e0: base edge index of this chunk (static int or traced multiple of chunk).
        for l in range(L):                                   # L is tiny & static
            d = paths[l:l + 1, :] - e0                       # (1, T)
            onehot = (d == base_iota).astype(jnp.float32)    # (chunk, T), consumed now
            row = scores_ref[l:l + 1, pl.ds(e0, chunk)]      # (1, chunk)
            # One-hot gather on the MXU; HIGHEST keeps f32 scores exact
            # (padded scores are 0, so out-of-range indices contribute 0).
            acc = acc + jax.lax.dot_general(
                row, onehot, (((1,), (0,)), ((), ())),
                precision=jax.lax.Precision.HIGHEST,
                preferred_element_type=jnp.float32)
        return acc

    acc = jnp.zeros((1, T), jnp.float32)
    if unroll_chunks:
        for c in range(num_chunks):
            acc = accum_chunk(acc, c * chunk)
    else:
        acc = jax.lax.fori_loop(
            0, num_chunks,
            lambda c, a: accum_chunk(a, pl.multiple_of(c * chunk, chunk)),
            acc)

    inv = pl.reciprocal(cnt + jnp.float32(EPS), approx=False)
    out_ref[...] = acc * inv


def edge_encoding(edge_embedding, edge_paths, edge_vector, *,
                  tile_nn_target: int = 1024):
    """Pallas TPU implementation of EdgeEncoding.forward.

    Args:
      edge_embedding: (B, E, D) float32
      edge_paths:     (B, N, N, L) integer path indices (may be invalid / negative)
      edge_vector:    (L, D) float32 parameter
    Returns:
      (B, N, N) float32 edge encoding.
    """
    B, E, D = edge_embedding.shape
    _, N, M_, L = edge_paths.shape
    NN = N * M_

    # Hoisted D-contraction, lane-dense on E.
    scores = jnp.einsum('bed,ld->ble',
                        edge_embedding.astype(jnp.float32),
                        edge_vector.astype(jnp.float32),
                        precision=jax.lax.Precision.HIGHEST)          # (B, L, E)

    # E chunking: sublane-sized chunks keep the per-chunk one-hot in vregs.
    chunk = 32 if E >= 32 else _round_up(E, 8)
    e_pad = _round_up(E, chunk)
    if e_pad != E:
        scores = jnp.pad(scores, ((0, 0), (0, 0), (0, e_pad - E)))    # zeros: safe
    num_chunks = e_pad // chunk

    # Lane-dense path layout + NN padded to a full lane-dense tile (-1 = invalid).
    # TODO(synk): edge_paths are reused across Graphormer layers; the transposed /
    # padded tensor could be computed once per graph instead of per call.
    paths = edge_paths.reshape(B, NN, L).astype(jnp.int32).transpose(0, 2, 1)  # (B, L, NN)
    tile_nn = min(int(tile_nn_target), _round_up(NN, 128))
    tile_nn = max(128, (tile_nn // 128) * 128)
    nn_pad = _round_up(NN, tile_nn)
    if nn_pad != NN:
        paths = jnp.pad(paths, ((0, 0), (0, 0), (0, nn_pad - NN)), constant_values=-1)
    num_tiles = nn_pad // tile_nn

    kernel = functools.partial(
        _edge_encoding_kernel,
        num_edges=E, num_chunks=num_chunks, chunk=chunk,
        max_path_distance=L, unroll_chunks=(num_chunks <= 16))

    out = pl.pallas_call(
        kernel,
        out_shape=jax.ShapeDtypeStruct((B, 1, nn_pad), jnp.float32),
        grid_spec=pltpu.PrefetchScalarGridSpec(
            num_scalar_prefetch=0,
            grid=(num_tiles, B),      # big axis first: balanced megacore split (v7x)
            in_specs=[
                # scores: tiny per-batch block, same for every NN tile.
                pl.BlockSpec((None, L, e_pad), lambda t, b: (b, 0, 0)),
                # paths: lane-dense NN tile.
                pl.BlockSpec((None, L, tile_nn), lambda t, b: (b, 0, t)),
            ],
            out_specs=pl.BlockSpec((None, 1, tile_nn), lambda t, b: (b, 0, t)),
        ),
        compiler_params=pltpu.CompilerParams(
            dimension_semantics=("parallel", "parallel"),
            vmem_limit_bytes=_vmem_limit_bytes()),
    )(scores, paths)

    return out[:, 0, :NN].reshape(B, N, M_)


def edge_encoding_ref(edge_embedding, edge_paths, edge_vector, eps=EPS):
    """Pure-JAX reference mirroring the PyTorch forward."""
    B, E, D = edge_embedding.shape
    valid = jnp.logical_and(edge_paths >= 0, edge_paths <= E - 1)
    safe = jnp.where(valid, edge_paths, 0)

    def per_batch(emb_b, safe_b, valid_b):
        g = emb_b[safe_b]                                    # (N, N, L, D)
        g = jnp.where(valid_b[..., None], g, 0.0)
        enc = jnp.einsum('nmld,ld->nm', g, edge_vector,
                         precision=jax.lax.Precision.HIGHEST)
        lengths = valid_b.sum(-1).astype(jnp.float32) + eps
        return enc / lengths

    return jax.vmap(per_batch)(edge_embedding, safe, valid)


if __name__ == "__main__":
    # Small deterministic setup: batch=2, nodes=8, edges=8, edge_dim=32, max_path=4.
    B, N, E, D, L = 2, 8, 8, 32, 4
    key = jax.random.PRNGKey(0)
    k_emb, k_vec, k_path = jax.random.split(key, 3)

    edge_embedding = jax.random.normal(k_emb, (B, E, D), dtype=jnp.float32)
    # Module initializes edge_vector to zeros; use random values so compute is exercised.
    edge_vector = 0.1 * jax.random.normal(k_vec, (L, D), dtype=jnp.float32)
    # Include out-of-range / negative indices to exercise invalid-path masking.
    edge_paths = jax.random.randint(k_path, (B, N, N, L), -2, E + 2, dtype=jnp.int32)

    fn = jax.jit(edge_encoding)
    out = fn(edge_embedding, edge_paths, edge_vector)
    out = jax.block_until_ready(out)

    ref = edge_encoding_ref(edge_embedding, edge_paths, edge_vector)
    np.testing.assert_allclose(np.asarray(out), np.asarray(ref), rtol=1e-5, atol=1e-5)

    print("KERNEL_OK")
</pallas_src>

<mosaic_0001>
module attributes {stable_mosaic.version = 11 : i64} {
  func.func @_edge_encoding_kernel(%arg0: i32, %arg1: i32, %arg2: memref<1x4x8xf32, #tpu.memory_space<vmem>>, %arg3: memref<1x4x128xi32, #tpu.memory_space<vmem>>, %arg4: memref<1x1x128xf32, #tpu.memory_space<vmem>>) attributes {dimension_semantics = [#tpu.dimension_semantics<parallel>, #tpu.dimension_semantics<parallel>], iteration_bounds = array<i64: 1, 2>, scalar_prefetch = 0 : i64, scratch_operands = 0 : i64, tpu.core_type = #tpu.core_type<tc>, window_params = [{transform_indices = @transform_0, window_bounds = array<i64: 1, 4, 8>}, {transform_indices = @transform_1, window_bounds = array<i64: 1, 4, 128>}, {transform_indices = @transform_2, window_bounds = array<i64: 1, 1, 128>}]} {
    %c0 = arith.constant 0 : index
    %c0_0 = arith.constant 0 : index
    %c0_1 = arith.constant 0 : index
    %0 = vector.load %arg3[%c0, %c0_0, %c0_1] : memref<1x4x128xi32, #tpu.memory_space<vmem>>, vector<1x4x128xi32>
    %1 = vector.shape_cast %0 : vector<1x4x128xi32> to vector<4x128xi32>
    %c0_i32 = arith.constant 0 : i32
    %2 = vector.broadcast %c0_i32 : i32 to vector<4x128xi32>
    %3 = arith.cmpi sge, %1, %2 : vector<4x128xi32>
    %c8_i32 = arith.constant 8 : i32
    %4 = vector.broadcast %c8_i32 : i32 to vector<4x128xi32>
    %5 = arith.cmpi slt, %1, %4 : vector<4x128xi32>
    %6 = arith.andi %3, %5 : vector<4x128xi1>
    %7 = arith.extui %6 : vector<4x128xi1> to vector<4x128xi32>
    %8 = arith.sitofp %7 : vector<4x128xi32> to vector<4x128xf32>
    %cst = arith.constant dense<0.000000e+00> : vector<128xf32>
    %9 = vector.multi_reduction <add>, %8, %cst [0] : vector<4x128xf32> to vector<128xf32>
    %10 = vector.shape_cast %9 : vector<128xf32> to vector<1x128xf32>
    %11 = tpu.iota {dimensions = array<i32: 0>} : vector<8x128xi32>
    %cst_2 = arith.constant 0.000000e+00 : f32
    %12 = vector.broadcast %cst_2 : f32 to vector<1x128xf32>
    %13 = vector.extract_strided_slice %1 {offsets = [0, 0], sizes = [1, 128], strides = [1, 1]} : vector<4x128xi32> to vector<1x128xi32>
    %c0_i32_3 = arith.constant 0 : i32
    %14 = vector.broadcast %c0_i32_3 : i32 to vector<1x128xi32>
    %15 = arith.subi %13, %14 : vector<1x128xi32>
    %16 = vector.broadcast %15 : vector<1x128xi32> to vector<8x128xi32>
    %17 = arith.cmpi eq, %16, %11 : vector<8x128xi32>
    %18 = arith.extui %17 : vector<8x128xi1> to vector<8x128xi32>
    %19 = arith.sitofp %18 : vector<8x128xi32> to vector<8x128xf32>
    %c0_4 = arith.constant 0 : index
    %c0_5 = arith.constant 0 : index
    %c0_6 = arith.constant 0 : index
    %20 = vector.load %arg2[%c0_4, %c0_5, %c0_6] : memref<1x4x8xf32, #tpu.memory_space<vmem>>, vector<1x1x8xf32>
    %21 = vector.shape_cast %20 : vector<1x1x8xf32> to vector<1x8xf32>
    %cst_7 = arith.constant dense<0.000000e+00> : vector<1x128xf32>
    %22 = tpu.matmul %21, %19, %cst_7 {dimension_numbers = #tpu.dot_dimension_numbers<[1], [0], [0], [1], [0, 0, 1, 1], [], []>, precision = #tpu.contract_precision<fp32>} : vector<1x8xf32>, vector<8x128xf32>, vector<1x128xf32> -> vector<1x128xf32>
    %23 = arith.addf %12, %22 : vector<1x128xf32>
    %24 = vector.extract_strided_slice %1 {offsets = [1, 0], sizes = [1, 128], strides = [1, 1]} : vector<4x128xi32> to vector<1x128xi32>
    %c0_i32_8 = arith.constant 0 : i32
    %25 = vector.broadcast %c0_i32_8 : i32 to vector<1x128xi32>
    %26 = arith.subi %24, %25 : vector<1x128xi32>
    %27 = vector.broadcast %26 : vector<1x128xi32> to vector<8x128xi32>
    %28 = arith.cmpi eq, %27, %11 : vector<8x128xi32>
    %29 = arith.extui %28 : vector<8x128xi1> to vector<8x128xi32>
    %30 = arith.sitofp %29 : vector<8x128xi32> to vector<8x128xf32>
    %c0_9 = arith.constant 0 : index
    %c1 = arith.constant 1 : index
    %c0_10 = arith.constant 0 : index
    %31 = vector.load %arg2[%c0_9, %c1, %c0_10] : memref<1x4x8xf32, #tpu.memory_space<vmem>>, vector<1x1x8xf32>
    %32 = vector.shape_cast %31 : vector<1x1x8xf32> to vector<1x8xf32>
    %cst_11 = arith.constant dense<0.000000e+00> : vector<1x128xf32>
    %33 = tpu.matmul %32, %30, %cst_11 {dimension_numbers = #tpu.dot_dimension_numbers<[1], [0], [0], [1], [0, 0, 1, 1], [], []>, precision = #tpu.contract_precision<fp32>} : vector<1x8xf32>, vector<8x128xf32>, vector<1x128xf32> -> vector<1x128xf32>
    %34 = arith.addf %23, %33 : vector<1x128xf32>
    %35 = vector.extract_strided_slice %1 {offsets = [2, 0], sizes = [1, 128], strides = [1, 1]} : vector<4x128xi32> to vector<1x128xi32>
    %c0_i32_12 = arith.constant 0 : i32
    %36 = vector.broadcast %c0_i32_12 : i32 to vector<1x128xi32>
    %37 = arith.subi %35, %36 : vector<1x128xi32>
    %38 = vector.broadcast %37 : vector<1x128xi32> to vector<8x128xi32>
    %39 = arith.cmpi eq, %38, %11 : vector<8x128xi32>
    %40 = arith.extui %39 : vector<8x128xi1> to vector<8x128xi32>
    %41 = arith.sitofp %40 : vector<8x128xi32> to vector<8x128xf32>
    %c0_13 = arith.constant 0 : index
    %c2 = arith.constant 2 : index
    %c0_14 = arith.constant 0 : index
    %42 = vector.load %arg2[%c0_13, %c2, %c0_14] : memref<1x4x8xf32, #tpu.memory_space<vmem>>, vector<1x1x8xf32>
    %43 = vector.shape_cast %42 : vector<1x1x8xf32> to vector<1x8xf32>
    %cst_15 = arith.constant dense<0.000000e+00> : vector<1x128xf32>
    %44 = tpu.matmul %43, %41, %cst_15 {dimension_numbers = #tpu.dot_dimension_numbers<[1], [0], [0], [1], [0, 0, 1, 1], [], []>, precision = #tpu.contract_precision<fp32>} : vector<1x8xf32>, vector<8x128xf32>, vector<1x128xf32> -> vector<1x128xf32>
    %45 = arith.addf %34, %44 : vector<1x128xf32>
    %46 = vector.extract_strided_slice %1 {offsets = [3, 0], sizes = [1, 128], strides = [1, 1]} : vector<4x128xi32> to vector<1x128xi32>
    %c0_i32_16 = arith.constant 0 : i32
    %47 = vector.broadcast %c0_i32_16 : i32 to vector<1x128xi32>
    %48 = arith.subi %46, %47 : vector<1x128xi32>
    %49 = vector.broadcast %48 : vector<1x128xi32> to vector<8x128xi32>
    %50 = arith.cmpi eq, %49, %11 : vector<8x128xi32>
    %51 = arith.extui %50 : vector<8x128xi1> to vector<8x128xi32>
    %52 = arith.sitofp %51 : vector<8x128xi32> to vector<8x128xf32>
    %c0_17 = arith.constant 0 : index
    %c3 = arith.constant 3 : index
    %c0_18 = arith.constant 0 : index
    %53 = vector.load %arg2[%c0_17, %c3, %c0_18] : memref<1x4x8xf32, #tpu.memory_space<vmem>>, vector<1x1x8xf32>
    %54 = vector.shape_cast %53 : vector<1x1x8xf32> to vector<1x8xf32>
    %cst_19 = arith.constant dense<0.000000e+00> : vector<1x128xf32>
    %55 = tpu.matmul %54, %52, %cst_19 {dimension_numbers = #tpu.dot_dimension_numbers<[1], [0], [0], [1], [0, 0, 1, 1], [], []>, precision = #tpu.contract_precision<fp32>} : vector<1x8xf32>, vector<8x128xf32>, vector<1x128xf32> -> vector<1x128xf32>
    %56 = arith.addf %45, %55 : vector<1x128xf32>
    %cst_20 = arith.constant 9.99999971E-10 : f32
    %57 = vector.broadcast %cst_20 : f32 to vector<1x128xf32>
    %58 = arith.addf %10, %57 : vector<1x128xf32>
    %59 = tpu.reciprocal %58 : vector<1x128xf32> -> vector<1x128xf32>
    %60 = arith.mulf %56, %59 : vector<1x128xf32>
    %c0_21 = arith.constant 0 : index
    %c0_22 = arith.constant 0 : index
    %c0_23 = arith.constant 0 : index
    %61 = vector.load %arg4[%c0_21, %c0_22, %c0_23] : memref<1x1x128xf32, #tpu.memory_space<vmem>>, vector<1x1x128xf32>
    %62 = vector.shape_cast %61 : vector<1x1x128xf32> to vector<1x128xf32>
    %63 = vector.shape_cast %60 : vector<1x128xf32> to vector<1x1x128xf32>
    tpu.vector_store %arg4[%c0_21, %c0_22, %c0_23], %63 {strides = array<i32>} : memref<1x1x128xf32, #tpu.memory_space<vmem>>, vector<1x1x128xf32>,
    return
  }
  func.func @transform_0(%arg0: i32, %arg1: i32) -> (i32, i32, i32) {
    %c0_i32 = arith.constant 0 : i32
    %c0_i32_0 = arith.constant 0 : i32
    %c0_i32_1 = arith.constant 0 : i32
    return %arg1, %c0_i32, %c0_i32_0 : i32, i32, i32
  }
  func.func @transform_1(%arg0: i32, %arg1: i32) -> (i32, i32, i32) {
    %c0_i32 = arith.constant 0 : i32
    %c0_i32_0 = arith.constant 0 : i32
    return %arg1, %c0_i32, %arg0 : i32, i32, i32
  }
  func.func @transform_2(%arg0: i32, %arg1: i32) -> (i32, i32, i32) {
    %c0_i32 = arith.constant 0 : i32
    %c0_i32_0 = arith.constant 0 : i32
    return %arg1, %c0_i32, %arg0 : i32, i32, i32
  }
}

</mosaic_0001>

<llo_original>
// kernel: squeeze.1
$region0: #{squeeze.1}
  %s0 = inlined_call_operand.vmem [shape: f32[2,64], index: 0, kind: input, shape index: {}]
  %s1 = inlined_call_operand.hbm [shape: f32[2,8,8], index: 1, kind: output, shape index: {}]
  $region1: #{squeeze.1} parent=0
    #allocation0 [shape = 'u8[8192]{0}', space=vmem, size = 0x2000, scoped, tag = 'operand span for operand 1']
    #allocation1 [shape = 's32[1]{0}', space=sflag, size = 0x4, scoped, tag = 'scoped memory for squeeze.1']
    #allocation2 [shape = 'u8[4096]{0}', space=vmem, size = 0x1000, scoped, tag = 'scoped mem for input reshape']
    %2 = vsyncpa [#allocation1], 0
    %s4 = sshllo.u32 0, 2
    %v5 = vld [vmem:[%s0] sm:%s4]
    %6 = vst [vmem:[#allocation2] sm:%s4] %v5
    %v7 = vld [vmem:[#allocation2] sm:$0x3]
    %vm8 = vcmask 64512
    %9 = vst.msk [vmem:[#allocation0] ss:$8 sm:$0x3] %vm8, %v7
    %v10 = vld [vmem:[#allocation2] sm:$0x3]
    %11 = vrot.lane.b32.xlu0 %v10, 120
    %v12 = vpop.permute.xlu0 %11
    %vm13 = vcmask 64512
    %s14 = scalar_lea.vmem [#allocation0], 1
    %15 = vst.msk [vmem:[%s14] ss:$8 sm:$0x3] %vm13, %v12
    %v16 = vld [vmem:[#allocation2] sm:$0x3]
    %17 = vrot.lane.b32.xlu0 %v16, 112
    %v18 = vpop.permute.xlu0 %17
    %vm19 = vcmask 64512
    %s20 = scalar_lea.vmem [#allocation0], 2
    %21 = vst.msk [vmem:[%s20] ss:$8 sm:$0x3] %vm19, %v18
    %v22 = vld [vmem:[#allocation2] sm:$0x3]
    %23 = vrot.lane.b32.xlu0 %v22, 104
    %v24 = vpop.permute.xlu0 %23
    %vm25 = vcmask 64512
    %s26 = scalar_lea.vmem [#allocation0], 3
    %27 = vst.msk [vmem:[%s26] ss:$8 sm:$0x3] %vm25, %v24
    %v28 = vld [vmem:[#allocation2] sm:$0x3]
    %29 = vrot.lane.b32.xlu0 %v28, 96
    %v30 = vpop.permute.xlu0 %29
    %vm31 = vcmask 64512
    %s32 = scalar_lea.vmem [#allocation0], 4
    %33 = vst.msk [vmem:[%s32] ss:$8 sm:$0x3] %vm31, %v30
    %v34 = vld [vmem:[#allocation2] sm:$0x3]
    %35 = vrot.lane.b32.xlu0 %v34, 88
    %v36 = vpop.permute.xlu0 %35
    %vm37 = vcmask 64512
    %s38 = scalar_lea.vmem [#allocation0], 5
    %39 = vst.msk [vmem:[%s38] ss:$8 sm:$0x3] %vm37, %v36
    %v40 = vld [vmem:[#allocation2] sm:$0x3]
    %41 = vrot.lane.b32.xlu0 %v40, 80
    %v42 = vpop.permute.xlu0 %41
    %vm43 = vcmask 64512
    %s44 = scalar_lea.vmem [#allocation0], 6
    %45 = vst.msk [vmem:[%s44] ss:$8 sm:$0x3] %vm43, %v42
    %v46 = vld [vmem:[#allocation2] sm:$0x3]
    %47 = vrot.lane.b32.xlu0 %v46, 72
    %v48 = vpop.permute.xlu0 %47
    %vm49 = vcmask 64512
    %s50 = scalar_lea.vmem [#allocation0], 7
    %51 = vst.msk [vmem:[%s50] ss:$8 sm:$0x3] %vm49, %v48
    %s53 = ssub.s32 256, 256
    %54 = vsyncadd [#allocation1], %s53
    %s56 = sshll.u32 [#allocation0], 4
    %s57 = int_to_ptr.vmem [resolvable:$true] %s56
    %59 = dma.vmem_to_hbm [thread:$0]  %s57, 256, %s1, [#allocation1]
    %60 = dma.done [#allocation1], 256
    %61 = vsyncpa [#allocation1], 1

// kernel: edge_encoding.1
$region0: #{edge_encoding.1}
  #allocation0 [shape = 'u32[]', space=smem, size = 0x4, offset = 0x4, fixed_abs, tag = 'smem constant byte address 0x4 - core index']
  #allocation1 [shape = 'u32[144,128]{1,0:T(1,128)}', space=vmem, size = 0x12000, scoped, tag = 'internal scratch']
  %s0 = inlined_call_operand.vmem [shape: f32[2,4,8], index: 0, kind: input, shape index: {}]
  %s1 = inlined_call_operand.vmem [shape: s32[2,4,128], index: 1, kind: input, shape index: {}]
  %s2 = inlined_call_operand.vmem [shape: f32[2,1,128], index: 2, kind: output, shape index: {}]
  %s3 = sld [smem:[#allocation0]]
  $region41: #{edge_encoding.1} parent=0
    _
  %s5 = ssub.s32 1, %s3
  %s6 = scalar_select 0, %s5, %s3
  loop: start=0, step=1, limit=4
  $region2: #{edge_encoding.1} parent=0 // loop_pre_header
    _
  $region3: #{edge_encoding.1} parent=0 // loop_header
    %s8 = sphi 0, %s12
    %p9 = scmp.ge.s32.totalorder %s8, 4
    %s15 = sphi 0, %s27
    %s16 = sphi 0, %s23
    %s17 = sphi 0, %s15
    %s18 = sphi 0, %s16
    %s19 = sphi 0, %s17
    %s20 = sphi 0, %s18
    %s30 = sphi 0, %s32
    %s33 = sphi 0, %s30
    %s34 = sphi 0, %s33
    %s50 = sphi 0, %s34
    %s58 = sphi 0, %s60
    %s61 = sphi 0, %s58
    %s62 = sphi 0, %s61
    %s78 = sphi 0, %s62
    %s86 = sphi 0, %s88
    %s89 = sphi 0, %s86
    %s90 = sphi 0, %s89
    %s106 = sphi 0, %s90
  $region4: #{edge_encoding.1} parent=0 // loop_header_branch
    %11 = sbr.rel (%p9) target = $region8
  $region5: #{edge_encoding.1} parent=0 // loop_body
    %s13 = ssub.s32 %s8, 1
    %s14 = ssub.s32 %s8, 2
    %s21 = sadd.s32 1, %s16
    %p22 = scmp.ge.s32.totalorder %s21, 2
    %s23 = scalar_select %p22, 0, %s21
    %s24 = sadd.s32 1, %s15
    %s25 = scalar_select %p22, %s24, %s15
    %p26 = scmp.ge.s32.totalorder %s25, 1
    %s27 = scalar_select %p26, 0, %s25
    %s28 = ssub.s32 %s16, %s23
    %p29 = scmp.eq.s32.totalorder %s28, 0
    %s31 = sadd.s32 %s30, 1
    %s32 = scalar_select %p29, %s30, %s31
    %p35 = pneg %p29
    %p36 = scmp.eq.s32.totalorder %s8, 1
    %p37 = por %p35, %p36
    %p38 = scmp.ne.s32.totalorder %s30, %s33
    %p39 = scmp.eq.s32.totalorder %s8, 0
    %p40 = por %p38, %p39
    %p41 = scmp.ne.s32.totalorder %s30, %s33
    %p42 = scmp.eq.s32.totalorder %s13, 1
    %p43 = por %p41, %p42
    %p44 = scmp.ne.s32.totalorder %s33, %s34
    %p45 = scmp.eq.s32.totalorder %s13, 0
    %p46 = por %p44, %p45
    %p47 = scmp.ne.s32.totalorder %s33, %s34
    %p48 = scmp.eq.s32.totalorder %s14, 1
    %p49 = por %p47, %p48
    %p51 = scmp.ne.s32.totalorder %s34, %s50
    %p52 = scmp.eq.s32.totalorder %s14, 0
    %p53 = por %p51, %p52
    %s54 = ssub.s32 %s16, %s23
    %s55 = ssub.s32 %s15, %s27
    %s56 = sor.u32 %s54, %s55
    %p57 = scmp.eq.s32.totalorder %s56, 0
    %s59 = sadd.s32 %s58, 1
    %s60 = scalar_select %p57, %s58, %s59
    %p63 = pneg %p57
    %p64 = scmp.eq.s32.totalorder %s8, 1
    %p65 = por %p63, %p64
    %p66 = scmp.ne.s32.totalorder %s58, %s61
    %p67 = scmp.eq.s32.totalorder %s8, 0
    %p68 = por %p66, %p67
    %p69 = scmp.ne.s32.totalorder %s58, %s61
    %p70 = scmp.eq.s32.totalorder %s13, 1
    %p71 = por %p69, %p70
    %p72 = scmp.ne.s32.totalorder %s61, %s62
    %p73 = scmp.eq.s32.totalorder %s13, 0
    %p74 = por %p72, %p73
    %p75 = scmp.ne.s32.totalorder %s61, %s62
    %p76 = scmp.eq.s32.totalorder %s14, 1
    %p77 = por %p75, %p76
    %p79 = scmp.ne.s32.totalorder %s62, %s78
    %p80 = scmp.eq.s32.totalorder %s14, 0
    %p81 = por %p79, %p80
    %s82 = ssub.s32 %s16, %s23
    %s83 = ssub.s32 %s15, %s27
    %s84 = sor.u32 %s82, %s83
    %p85 = scmp.eq.s32.totalorder %s84, 0
    %s87 = sadd.s32 %s86, 1
    %s88 = scalar_select %p85, %s86, %s87
    %p91 = pneg %p85
    %p92 = scmp.eq.s32.totalorder %s8, 1
    %p93 = por %p91, %p92
    %p94 = scmp.ne.s32.totalorder %s86, %s89
    %p95 = scmp.eq.s32.totalorder %s8, 0
    %p96 = por %p94, %p95
    %p97 = scmp.ne.s32.totalorder %s86, %s89
    %p98 = scmp.eq.s32.totalorder %s13, 1
    %p99 = por %p97, %p98
    %p100 = scmp.ne.s32.totalorder %s89, %s90
    %p101 = scmp.eq.s32.totalorder %s13, 0
    %p102 = por %p100, %p101
    %p103 = scmp.ne.s32.totalorder %s89, %s90
    %p104 = scmp.eq.s32.totalorder %s14, 1
    %p105 = por %p103, %p104
    %p107 = scmp.ne.s32.totalorder %s90, %s106
    %p108 = scmp.eq.s32.totalorder %s14, 0
    %p109 = por %p107, %p108
    %p110 = scmp.le.s32.totalorder 1, %s8
    %p111 = scmp.lt.s32.totalorder %s8, 3
    %p112 = pnand %p110, %p111
    %p113 = pneg %p112
    // Predicated region
    $region9: #{edge_encoding.1} parent=5 // pred_check
      _
    $region10: #{edge_encoding.1} parent=5 // pred_check_branch
      %115 = sbr.rel (%p112) target = $region12
    $region11: #{edge_encoding.1} parent=5 // pred_region
      %s116 = ssub.s32 %s8, 1
    $region12: #{edge_encoding.1} parent=5 // pred_fallthru
      _
    %p117 = scmp.lt.s32.totalorder %s8, 2
    // Predicated region
    $region13: #{edge_encoding.1} parent=5 // pred_check
      %p118 = pneg %p117
    $region14: #{edge_encoding.1} parent=5 // pred_check_branch
      %120 = sbr.rel (%p118) target = $region16
    $region15: #{edge_encoding.1} parent=5 // pred_region
      // Predicated region
      $region17: #{edge_encoding.1} parent=15 // pred_check
        %p121 = pneg %p40
      $region18: #{edge_encoding.1} parent=15 // pred_check_branch
        %123 = sbr.rel (%p121) target = $region20
      $region19: #{edge_encoding.1} parent=15 // pred_region
        %p124 = scmp.lt.s32.totalorder %s16, 1
        %s125 = scalar_select %p124, %s16, 1
        %s126 = smul.addr %s125, 4
        %s127 = scalar_lea.vmem %s0, %s126
      $region20: #{edge_encoding.1} parent=15 // pred_fallthru
        _
      // Predicated region
      $region21: #{edge_encoding.1} parent=15 // pred_check
        %p128 = pneg %p68
      $region22: #{edge_encoding.1} parent=15 // pred_check_branch
        %130 = sbr.rel (%p128) target = $region24
      $region23: #{edge_encoding.1} parent=15 // pred_region
        %p131 = scmp.lt.s32.totalorder %s16, 1
        %s132 = scalar_select %p131, %s16, 1
        %p133 = scmp.lt.s32.totalorder %s15, 0
        %s134 = scalar_select %p133, %s15, 0
        %s135 = sadd.s32 %s134, %s132
        %s136 = smul.addr %s135, 4
        %s137 = scalar_lea.vmem %s1, %s136
      $region24: #{edge_encoding.1} parent=15 // pred_fallthru
        _
    $region16: #{edge_encoding.1} parent=5 // pred_fallthru
      _
    %p138 = scmp.le.s32.totalorder 1, %s8
    %p139 = scmp.lt.s32.totalorder %s8, 3
    %p140 = pnand %p138, %p139
    %p141 = pneg %p140
    // Predicated region
    $region25: #{edge_encoding.1} parent=5 // pred_check
      _
    $region26: #{edge_encoding.1} parent=5 // pred_check_branch
      %143 = sbr.rel (%p140) target = $region28
    $region27: #{edge_encoding.1} parent=5 // pred_region
      %s144 = ssub.s32 %s8, 1
      %p145 = scmp.lt.s32.totalorder %s18, 1
      %s146 = scalar_select %p145, %s18, 1
      %s147 = smul.addr %s146, 4
      %s148 = scalar_lea.vmem %s0, %s147
      %p149 = pneg %p46
      %p150 = pneg %p43
      %p151 = scmp.lt.s32.totalorder %s18, 1
      %s152 = scalar_select %p151, %s18, 1
      %p153 = scmp.lt.s32.totalorder %s17, 0
      %s154 = scalar_select %p153, %s17, 0
      %s155 = sadd.s32 %s154, %s152
      %s156 = smul.addr %s155, 4
      %s157 = scalar_lea.vmem %s1, %s156
      %p158 = pneg %p74
      %p159 = pneg %p71
      %p160 = pneg %p102
      %p161 = pneg %p99
      %p162 = scmp.lt.s32.totalorder %s18, 1
      %s163 = scalar_select %p162, %s18, 1
      %p164 = scmp.lt.s32.totalorder %s17, 0
      %s165 = scalar_select %p164, %s17, 0
      %s166 = sadd.s32 %s165, %s163
      %s167 = scalar_lea.vmem %s2, %s166
      %p168 = scmp.lt.s32.totalorder %s18, 1
      %s169 = scalar_select %p168, %s18, 1
      %s170 = smul.addr %s169, 4
      %s171 = scalar_lea.vmem %s0, %s170
      %p172 = scmp.lt.s32.totalorder %s18, 1
      %s173 = scalar_select %p172, %s18, 1
      %p174 = scmp.lt.s32.totalorder %s17, 0
      %s175 = scalar_select %p174, %s17, 0
      %s176 = sadd.s32 %s175, %s173
      %s177 = smul.addr %s176, 4
      %s178 = scalar_lea.vmem %s1, %s177
      %p179 = scmp.lt.s32.totalorder %s18, 1
      %s180 = scalar_select %p179, %s18, 1
      %p181 = scmp.lt.s32.totalorder %s17, 0
      %s182 = scalar_select %p181, %s17, 0
      %s183 = sadd.s32 %s182, %s180
      %s184 = scalar_lea.vmem %s2, %s183
      %v185 = vld [vmem:[%s178] sm:$0xf]
      %vm186 = vcmp.ge.s32.totalorder %v185, 0
      %vm187 = vcmp.lt.s32.totalorder %v185, 8
      %vm188 = vmand %vm186, %vm187
      %v189 = vsel %vm188, 1, 0
      %v190 = vcvt.s32.f32 %v189
      %vm191 = vcmask 1043456
      %v192 = vsel %vm191, %v190, 0.0
      %v193 = vrot.slane %v192, 4
      %v194 = vadd.f32 %v192, %v193
      %v195 = vrot.slane %v194, 2
      %v196 = vadd.f32 %v194, %v195
      %v197 = vrot.slane %v196, 1
      %v198 = vadd.f32 %v196, %v197
      %v199 = vlaneseq
      %v200 = vshrl.u32 %v199, 7
      %v201 = vlaneseq
      %v202 = vshrl.u32 %v201, 7
      %v203 = vsub.s32 0, %v202
      %v204 = vrot.slane %v185, %v203
      %vm205 = vcmp.eq.s32.totalorder %v204, %v200
      %v206 = vsel %vm205, 1, 0
      %v207 = vcvt.s32.f32 %v206
      %v208 = vld [vmem:[%s171] sm:$0x1]
      %v209 = vlaneseq
      %v210 = vshrl.u32 %v209, 7
      %v211 = vsub.s32 1, %v210
      %v212 = vrot.slane %v185, %v211
      %vm213 = vcmp.eq.s32.totalorder %v212, %v200
      %v214 = vsel %vm213, 1, 0
      %v215 = vcvt.s32.f32 %v214
      %v216 = vld [vmem:[%s171 + $0x1] sm:$0x1]
      %vm217 = vcmask 64512
      %v219 = vsel %vm217, %v216, 0
      %221 = vmatprep.subr.mxu0 0.0
      %v222 = vand.u32 %v215, 4294901760
      %223 = vmatpush1.msra.mxu0 %v222
      %224 = vmatprep.subr.mxu0 0.0
      %225 = vmatpush1.msra.mxu0 0.0
      %226 = vmatprep.subr.mxu0 0.0
      %227 = vmatpush1.msra.mxu0 0.0
      %228 = vmatprep.subr.mxu0 0.0
      %229 = vmatpush1.msra.mxu0 0.0
      %230 = vmatprep.subr.mxu0 0.0
      %231 = vmatpush1.msra.mxu0 0.0
      %232 = vmatprep.subr.mxu0 0.0
      %233 = vmatpush1.msra.mxu0 0.0
      %234 = vmatprep.subr.mxu0 0.0
      %235 = vmatpush1.msra.mxu0 0.0
      %236 = vmatprep.subr.mxu0 0.0
      %237 = vmatpush1.msra.mxu0 0.0
      %238 = vmatprep.subr.mxu0 0.0
      %239 = vmatpush1.msra.mxu0 0.0
      %240 = vmatprep.subr.mxu0 0.0
      %241 = vmatpush1.msra.mxu0 0.0
      %242 = vmatprep.subr.mxu0 0.0
      %243 = vmatpush1.msra.mxu0 0.0
      %244 = vmatprep.subr.mxu0 0.0
      %245 = vmatpush1.msra.mxu0 0.0
      %246 = vmatprep.subr.mxu0 0.0
      %247 = vmatpush1.msra.mxu0 0.0
      %248 = vmatprep.subr.mxu0 0.0
      %249 = vmatpush1.msra.mxu0 0.0
      %250 = vmatprep.subr.mxu0 0.0
      %251 = vmatpush1.msra.mxu0 0.0
      %252 = vmatprep.subr.mxu0 0.0
      %253 = vmatpush1.msra.mxu0 0.0
      %254 = vmatprep.subr.mxu0 0.0
      %255 = vmatpush1.msra.mxu0 0.0
      %256 = vmatprep.subr.mxu0 0.0
      %257 = vmatpush1.msra.mxu0 0.0
      %258 = vmatprep.subr.mxu0 0.0
      %259 = vmatpush1.msra.mxu0 0.0
      %260 = vmatprep.subr.mxu0 0.0
      %261 = vmatpush1.msra.mxu0 0.0
      %262 = vmatprep.subr.mxu0 0.0
      %263 = vmatpush1.msra.mxu0 0.0
      %264 = vmatprep.subr.mxu0 0.0
      %265 = vmatpush1.msra.mxu0 0.0
      %266 = vmatprep.subr.mxu0 0.0
      %267 = vmatpush1.msra.mxu0 0.0
      %268 = vmatprep.subr.mxu0 0.0
      %269 = vmatpush1.msra.mxu0 0.0
      %270 = vmatprep.subr.mxu0 0.0
      %271 = vmatpush1.msra.mxu0 0.0
      %272 = vmatprep.subr.mxu0 0.0
      %273 = vmatpush1.msra.mxu0 0.0
      %274 = vmatprep.subr.mxu0 0.0
      %275 = vmatpush1.msra.mxu0 0.0
      %276 = vmatprep.subr.mxu0 0.0
      %277 = vmatpush1.msra.mxu0 0.0
      %278 = vmatprep.subr.mxu0 0.0
      %279 = vmatpush1.msra.mxu0 0.0
      %280 = vmatprep.subr.mxu0 0.0
      %281 = vmatpush1.msra.mxu0 0.0
      %282 = vmatprep.subr.mxu0 0.0
      %283 = vmatpush1.msra.mxu0 0.0
      %284 = vmatprep.subr.mxu0 0.0
      %285 = vmatpush1.msra.mxu0 0.0
      %286 = vmatprep.mubr.f32.mxu0 0.0
      %v287 = vand.u32 %v219, 4294901760
      %v288 = vsub.f32 %v219, %v287
      %v289 = vand.u32 %v288, 4294901760
      %v290 = vsub.f32 %v288, %v289
      %v291 = vand.u32 %v290, 4294901760
      %292 = vmatmul.mubr.f32.gmra.mrb[0].mxu0 %v291
      %v293 = vpop.f32.mrb[0].mxu0
      %v294 = vadd.f32 0.0, %v293
      %v295 = vpop.f32.mrb[0].mxu0
      %296 = vdwg.mxu0
      %297 = vmatprep.subr.mxu0 0.0
      %v298 = vand.u32 %v215, 4294901760
      %v299 = vsub.f32 %v215, %v298
      %v300 = vand.u32 %v299, 4294901760
      %v301 = vsub.f32 %v299, %v300
      %v302 = vand.u32 %v301, 4294901760
      %303 = vmatpush1.msra.mxu0 %v302
      %304 = vmatprep.subr.mxu0 0.0
      %305 = vmatpush1.msra.mxu0 0.0
      %306 = vmatprep.subr.mxu0 0.0
      %307 = vmatpush1.msra.mxu0 0.0
      %308 = vmatprep.subr.mxu0 0.0
      %309 = vmatpush1.msra.mxu0 0.0
      %310 = vmatprep.subr.mxu0 0.0
      %311 = vmatpush1.msra.mxu0 0.0
      %312 = vmatprep.subr.mxu0 0.0
      %313 = vmatpush1.msra.mxu0 0.0
      %314 = vmatprep.subr.mxu0 0.0
      %315 = vmatpush1.msra.mxu0 0.0
      %316 = vmatprep.subr.mxu0 0.0
      %317 = vmatpush1.msra.mxu0 0.0
      %318 = vmatprep.subr.mxu0 0.0
      %319 = vmatpush1.msra.mxu0 0.0
      %320 = vmatprep.subr.mxu0 0.0
      %321 = vmatpush1.msra.mxu0 0.0
      %322 = vmatprep.subr.mxu0 0.0
      %323 = vmatpush1.msra.mxu0 0.0
      %324 = vmatprep.subr.mxu0 0.0
      %325 = vmatpush1.msra.mxu0 0.0
      %326 = vmatprep.subr.mxu0 0.0
      %327 = vmatpush1.msra.mxu0 0.0
      %328 = vmatprep.subr.mxu0 0.0
      %329 = vmatpush1.msra.mxu0 0.0
      %330 = vmatprep.subr.mxu0 0.0
      %331 = vmatpush1.msra.mxu0 0.0
      %332 = vmatprep.subr.mxu0 0.0
      %333 = vmatpush1.msra.mxu0 0.0
      %334 = vmatprep.subr.mxu0 0.0
      %335 = vmatpush1.msra.mxu0 0.0
      %336 = vmatprep.subr.mxu0 0.0
      %337 = vmatpush1.msra.mxu0 0.0
      %338 = vmatprep.subr.mxu0 0.0
      %339 = vmatpush1.msra.mxu0 0.0
      %340 = vmatprep.subr.mxu0 0.0
      %341 = vmatpush1.msra.mxu0 0.0
      %342 = vmatprep.subr.mxu0 0.0
      %343 = vmatpush1.msra.mxu0 0.0
      %344 = vmatprep.subr.mxu0 0.0
      %345 = vmatpush1.msra.mxu0 0.0
      %346 = vmatprep.subr.mxu0 0.0
      %347 = vmatpush1.msra.mxu0 0.0
      %348 = vmatprep.subr.mxu0 0.0
      %349 = vmatpush1.msra.mxu0 0.0
      %350 = vmatprep.subr.mxu0 0.0
      %351 = vmatpush1.msra.mxu0 0.0
      %352 = vmatprep.subr.mxu0 0.0
      %353 = vmatpush1.msra.mxu0 0.0
      %354 = vmatprep.subr.mxu0 0.0
      %355 = vmatpush1.msra.mxu0 0.0
      %356 = vmatprep.subr.mxu0 0.0
      %357 = vmatpush1.msra.mxu0 0.0
      %358 = vmatprep.subr.mxu0 0.0
      %359 = vmatpush1.msra.mxu0 0.0
      %360 = vmatprep.subr.mxu0 0.0
      %361 = vmatpush1.msra.mxu0 0.0
      %362 = vmatprep.subr.mxu0 0.0
      %363 = vmatpush1.msra.mxu0 0.0
      %364 = vmatprep.subr.mxu0 0.0
      %365 = vmatpush1.msra.mxu0 0.0
      %366 = vmatprep.mubr.f32.mxu0 0.0
      %v367 = vand.u32 %v219, 4294901760
      %368 = vmatmul.mubr.f32.gmra.mrb[0].mxu0 %v367
      %v369 = vpop.f32.mrb[0].mxu0
      %v370 = vadd.f32 %v294, %v369
      %v371 = vpop.f32.mrb[0].mxu0
      %372 = vdwg.mxu0
      %373 = vmatprep.subr.mxu0 0.0
      %v374 = vand.u32 %v215, 4294901760
      %v375 = vsub.f32 %v215, %v374
      %376 = vmatpush1.msra.mxu0 %v375
      %377 = vmatprep.subr.mxu0 0.0
      %378 = vmatpush1.msra.mxu0 0.0
      %379 = vmatprep.subr.mxu0 0.0
      %380 = vmatpush1.msra.mxu0 0.0
      %381 = vmatprep.subr.mxu0 0.0
      %382 = vmatpush1.msra.mxu0 0.0
      %383 = vmatprep.subr.mxu0 0.0
      %384 = vmatpush1.msra.mxu0 0.0
      %385 = vmatprep.subr.mxu0 0.0
      %386 = vmatpush1.msra.mxu0 0.0
      %387 = vmatprep.subr.mxu0 0.0
      %388 = vmatpush1.msra.mxu0 0.0
      %389 = vmatprep.subr.mxu0 0.0
      %390 = vmatpush1.msra.mxu0 0.0
      %391 = vmatprep.subr.mxu0 0.0
      %392 = vmatpush1.msra.mxu0 0.0
      %393 = vmatprep.subr.mxu0 0.0
      %394 = vmatpush1.msra.mxu0 0.0
      %395 = vmatprep.subr.mxu0 0.0
      %396 = vmatpush1.msra.mxu0 0.0
      %397 = vmatprep.subr.mxu0 0.0
      %398 = vmatpush1.msra.mxu0 0.0
      %399 = vmatprep.subr.mxu0 0.0
      %400 = vmatpush1.msra.mxu0 0.0
      %401 = vmatprep.subr.mxu0 0.0
      %402 = vmatpush1.msra.mxu0 0.0
      %403 = vmatprep.subr.mxu0 0.0
      %404 = vmatpush1.msra.mxu0 0.0
      %405 = vmatprep.subr.mxu0 0.0
      %406 = vmatpush1.msra.mxu0 0.0
      %407 = vmatprep.subr.mxu0 0.0
      %408 = vmatpush1.msra.mxu0 0.0
      %409 = vmatprep.subr.mxu0 0.0
      %410 = vmatpush1.msra.mxu0 0.0
      %411 = vmatprep.subr.mxu0 0.0
      %412 = vmatpush1.msra.mxu0 0.0
      %413 = vmatprep.subr.mxu0 0.0
      %414 = vmatpush1.msra.mxu0 0.0
      %415 = vmatprep.subr.mxu0 0.0
      %416 = vmatpush1.msra.mxu0 0.0
      %417 = vmatprep.subr.mxu0 0.0
      %418 = vmatpush1.msra.mxu0 0.0
      %419 = vmatprep.subr.mxu0 0.0
      %420 = vmatpush1.msra.mxu0 0.0
      %421 = vmatprep.subr.mxu0 0.0
      %422 = vmatpush1.msra.mxu0 0.0
      %423 = vmatprep.subr.mxu0 0.0
      %424 = vmatpush1.msra.mxu0 0.0
      %425 = vmatprep.subr.mxu0 0.0
      %426 = vmatpush1.msra.mxu0 0.0
      %427 = vmatprep.subr.mxu0 0.0
      %428 = vmatpush1.msra.mxu0 0.0
      %429 = vmatprep.subr.mxu0 0.0
      %430 = vmatpush1.msra.mxu0 0.0
      %431 = vmatprep.subr.mxu0 0.0
      %432 = vmatpush1.msra.mxu0 0.0
      %433 = vmatprep.subr.mxu0 0.0
      %434 = vmatpush1.msra.mxu0 0.0
      %435 = vmatprep.subr.mxu0 0.0
      %436 = vmatpush1.msra.mxu0 0.0
      %437 = vmatprep.subr.mxu0 0.0
      %438 = vmatpush1.msra.mxu0 0.0
      %439 = vmatprep.mubr.f32.mxu0 0.0
      %v440 = vand.u32 %v219, 4294901760
      %v441 = vsub.f32 %v219, %v440
      %442 = vmatmul.mubr.f32.gmra.mrb[0].mxu0 %v441
      %v443 = vpop.f32.mrb[0].mxu0
      %v444 = vadd.f32 %v370, %v443
      %v445 = vpop.f32.mrb[0].mxu0
      %446 = vdwg.mxu0
      %447 = vmatprep.subr.mxu0 0.0
      %v448 = vand.u32 %v215, 4294901760
      %449 = vmatpush1.msra.mxu0 %v448
      %450 = vmatprep.subr.mxu0 0.0
      %451 = vmatpush1.msra.mxu0 0.0
      %452 = vmatprep.subr.mxu0 0.0
      %453 = vmatpush1.msra.mxu0 0.0
      %454 = vmatprep.subr.mxu0 0.0
      %455 = vmatpush1.msra.mxu0 0.0
      %456 = vmatprep.subr.mxu0 0.0
      %457 = vmatpush1.msra.mxu0 0.0
      %458 = vmatprep.subr.mxu0 0.0
      %459 = vmatpush1.msra.mxu0 0.0
      %460 = vmatprep.subr.mxu0 0.0
      %461 = vmatpush1.msra.mxu0 0.0
      %462 = vmatprep.subr.mxu0 0.0
      %463 = vmatpush1.msra.mxu0 0.0
      %464 = vmatprep.subr.mxu0 0.0
      %465 = vmatpush1.msra.mxu0 0.0
      %466 = vmatprep.subr.mxu0 0.0
      %467 = vmatpush1.msra.mxu0 0.0
      %468 = vmatprep.subr.mxu0 0.0
      %469 = vmatpush1.msra.mxu0 0.0
      %470 = vmatprep.subr.mxu0 0.0
      %471 = vmatpush1.msra.mxu0 0.0
      %472 = vmatprep.subr.mxu0 0.0
      %473 = vmatpush1.msra.mxu0 0.0
      %474 = vmatprep.subr.mxu0 0.0
      %475 = vmatpush1.msra.mxu0 0.0
      %476 = vmatprep.subr.mxu0 0.0
      %477 = vmatpush1.msra.mxu0 0.0
      %478 = vmatprep.subr.mxu0 0.0
      %479 = vmatpush1.msra.mxu0 0.0
      %480 = vmatprep.subr.mxu0 0.0
      %481 = vmatpush1.msra.mxu0 0.0
      %482 = vmatprep.subr.mxu0 0.0
      %483 = vmatpush1.msra.mxu0 0.0
      %484 = vmatprep.subr.mxu0 0.0
      %485 = vmatpush1.msra.mxu0 0.0
      %486 = vmatprep.subr.mxu0 0.0
      %487 = vmatpush1.msra.mxu0 0.0
      %488 = vmatprep.subr.mxu0 0.0
      %489 = vmatpush1.msra.mxu0 0.0
      %490 = vmatprep.subr.mxu0 0.0
      %491 = vmatpush1.msra.mxu0 0.0
      %492 = vmatprep.subr.mxu0 0.0
      %493 = vmatpush1.msra.mxu0 0.0
      %494 = vmatprep.subr.mxu0 0.0
      %495 = vmatpush1.msra.mxu0 0.0
      %496 = vmatprep.subr.mxu0 0.0
      %497 = vmatpush1.msra.mxu0 0.0
      %498 = vmatprep.subr.mxu0 0.0
      %499 = vmatpush1.msra.mxu0 0.0
      %500 = vmatprep.subr.mxu0 0.0
      %501 = vmatpush1.msra.mxu0 0.0
      %502 = vmatprep.subr.mxu0 0.0
      %503 = vmatpush1.msra.mxu0 0.0
      %504 = vmatprep.subr.mxu0 0.0
      %505 = vmatpush1.msra.mxu0 0.0
      %506 = vmatprep.subr.mxu0 0.0
      %507 = vmatpush1.msra.mxu0 0.0
      %508 = vmatprep.subr.mxu0 0.0
      %509 = vmatpush1.msra.mxu0 0.0
      %510 = vmatprep.subr.mxu0 0.0
      %511 = vmatpush1.msra.mxu0 0.0
      %512 = vmatprep.mubr.f32.mxu0 0.0
      %v513 = vand.u32 %v219, 4294901760
      %v514 = vsub.f32 %v219, %v513
      %v515 = vand.u32 %v514, 4294901760
      %516 = vmatmul.mubr.f32.gmra.mrb[0].mxu0 %v515
      %v517 = vpop.f32.mrb[0].mxu0
      %v518 = vadd.f32 %v444, %v517
      %v519 = vpop.f32.mrb[0].mxu0
      %520 = vdwg.mxu0
      %521 = vmatprep.subr.mxu0 0.0
      %v522 = vand.u32 %v215, 4294901760
      %v523 = vsub.f32 %v215, %v522
      %v524 = vand.u32 %v523, 4294901760
      %525 = vmatpush1.msra.mxu0 %v524
      %526 = vmatprep.subr.mxu0 0.0
      %527 = vmatpush1.msra.mxu0 0.0
      %528 = vmatprep.subr.mxu0 0.0
      %529 = vmatpush1.msra.mxu0 0.0
      %530 = vmatprep.subr.mxu0 0.0
      %531 = vmatpush1.msra.mxu0 0.0
      %532 = vmatprep.subr.mxu0 0.0
      %533 = vmatpush1.msra.mxu0 0.0
      %534 = vmatprep.subr.mxu0 0.0
      %535 = vmatpush1.msra.mxu0 0.0
      %536 = vmatprep.subr.mxu0 0.0
      %537 = vmatpush1.msra.mxu0 0.0
      %538 = vmatprep.subr.mxu0 0.0
      %539 = vmatpush1.msra.mxu0 0.0
      %540 = vmatprep.subr.mxu0 0.0
      %541 = vmatpush1.msra.mxu0 0.0
      %542 = vmatprep.subr.mxu0 0.0
      %543 = vmatpush1.msra.mxu0 0.0
      %544 = vmatprep.subr.mxu0 0.0
      %545 = vmatpush1.msra.mxu0 0.0
      %546 = vmatprep.subr.mxu0 0.0
      %547 = vmatpush1.msra.mxu0 0.0
      %548 = vmatprep.subr.mxu0 0.0
      %549 = vmatpush1.msra.mxu0 0.0
      %550 = vmatprep.subr.mxu0 0.0
      %551 = vmatpush1.msra.mxu0 0.0
      %552 = vmatprep.subr.mxu0 0.0
      %553 = vmatpush1.msra.mxu0 0.0
      %554 = vmatprep.subr.mxu0 0.0
      %555 = vmatpush1.msra.mxu0 0.0
      %556 = vmatprep.subr.mxu0 0.0
      %557 = vmatpush1.msra.mxu0 0.0
      %558 = vmatprep.subr.mxu0 0.0
      %559 = vmatpush1.msra.mxu0 0.0
      %560 = vmatprep.subr.mxu0 0.0
      %561 = vmatpush1.msra.mxu0 0.0
      %562 = vmatprep.subr.mxu0 0.0
      %563 = vmatpush1.msra.mxu0 0.0
      %564 = vmatprep.subr.mxu0 0.0
      %565 = vmatpush1.msra.mxu0 0.0
      %566 = vmatprep.subr.mxu0 0.0
      %567 = vmatpush1.msra.mxu0 0.0
      %568 = vmatprep.subr.mxu0 0.0
      %569 = vmatpush1.msra.mxu0 0.0
      %570 = vmatprep.subr.mxu0 0.0
      %571 = vmatpush1.msra.mxu0 0.0
      %572 = vmatprep.subr.mxu0 0.0
      %573 = vmatpush1.msra.mxu0 0.0
      %574 = vmatprep.subr.mxu0 0.0
      %575 = vmatpush1.msra.mxu0 0.0
      %576 = vmatprep.subr.mxu0 0.0
      %577 = vmatpush1.msra.mxu0 0.0
      %578 = vmatprep.subr.mxu0 0.0
      %579 = vmatpush1.msra.mxu0 0.0
      %580 = vmatprep.subr.mxu0 0.0
      %581 = vmatpush1.msra.mxu0 0.0
      %582 = vmatprep.subr.mxu0 0.0
      %583 = vmatpush1.msra.mxu0 0.0
      %584 = vmatprep.subr.mxu0 0.0
      %585 = vmatpush1.msra.mxu0 0.0
      %586 = vmatprep.subr.mxu0 0.0
      %587 = vmatpush1.msra.mxu0 0.0
      %588 = vmatprep.mubr.f32.mxu0 0.0
      %v589 = vand.u32 %v219, 4294901760
      %590 = vmatmul.mubr.f32.gmra.mrb[0].mxu0 %v589
      %v591 = vpop.f32.mrb[0].mxu0
      %v592 = vadd.f32 %v518, %v591
      %v593 = vpop.f32.mrb[0].mxu0
      %594 = vdwg.mxu0
      %595 = vmatprep.subr.mxu0 0.0
      %v596 = vand.u32 %v215, 4294901760
      %597 = vmatpush1.msra.mxu0 %v596
      %598 = vmatprep.subr.mxu0 0.0
      %599 = vmatpush1.msra.mxu0 0.0
      %600 = vmatprep.subr.mxu0 0.0
      %601 = vmatpush1.msra.mxu0 0.0
      %602 = vmatprep.subr.mxu0 0.0
      %603 = vmatpush1.msra.mxu0 0.0
      %604 = vmatprep.subr.mxu0 0.0
      %605 = vmatpush1.msra.mxu0 0.0
      %606 = vmatprep.subr.mxu0 0.0
      %607 = vmatpush1.msra.mxu0 0.0
      %608 = vmatprep.subr.mxu0 0.0
      %609 = vmatpush1.msra.mxu0 0.0
      %610 = vmatprep.subr.mxu0 0.0
      %611 = vmatpush1.msra.mxu0 0.0
      %612 = vmatprep.subr.mxu0 0.0
      %613 = vmatpush1.msra.mxu0 0.0
      %614 = vmatprep.subr.mxu0 0.0
      %615 = vmatpush1.msra.mxu0 0.0
      %616 = vmatprep.subr.mxu0 0.0
      %617 = vmatpush1.msra.mxu0 0.0
      %618 = vmatprep.subr.mxu0 0.0
      %619 = vmatpush1.msra.mxu0 0.0
      %620 = vmatprep.subr.mxu0 0.0
      %621 = vmatpush1.msra.mxu0 0.0
      %622 = vmatprep.subr.mxu0 0.0
      %623 = vmatpush1.msra.mxu0 0.0
      %624 = vmatprep.subr.mxu0 0.0
      %625 = vmatpush1.msra.mxu0 0.0
      %626 = vmatprep.subr.mxu0 0.0
      %627 = vmatpush1.msra.mxu0 0.0
      %628 = vmatprep.subr.mxu0 0.0
      %629 = vmatpush1.msra.mxu0 0.0
      %630 = vmatprep.subr.mxu0 0.0
      %631 = vmatpush1.msra.mxu0 0.0
      %632 = vmatprep.subr.mxu0 0.0
      %633 = vmatpush1.msra.mxu0 0.0
      %634 = vmatprep.subr.mxu0 0.0
      %635 = vmatpush1.msra.mxu0 0.0
      %636 = vmatprep.subr.mxu0 0.0
      %637 = vmatpush1.msra.mxu0 0.0
      %638 = vmatprep.subr.mxu0 0.0
      %639 = vmatpush1.msra.mxu0 0.0
      %640 = vmatprep.subr.mxu0 0.0
      %641 = vmatpush1.msra.mxu0 0.0
      %642 = vmatprep.subr.mxu0 0.0
      %643 = vmatpush1.msra.mxu0 0.0
      %644 = vmatprep.subr.mxu0 0.0
      %645 = vmatpush1.msra.mxu0 0.0
      %646 = vmatprep.subr.mxu0 0.0
      %647 = vmatpush1.msra.mxu0 0.0
      %648 = vmatprep.subr.mxu0 0.0
      %649 = vmatpush1.msra.mxu0 0.0
      %650 = vmatprep.subr.mxu0 0.0
      %651 = vmatpush1.msra.mxu0 0.0
      %652 = vmatprep.subr.mxu0 0.0
      %653 = vmatpush1.msra.mxu0 0.0
      %654 = vmatprep.subr.mxu0 0.0
      %655 = vmatpush1.msra.mxu0 0.0
      %656 = vmatprep.subr.mxu0 0.0
      %657 = vmatpush1.msra.mxu0 0.0
      %658 = vmatprep.subr.mxu0 0.0
      %659 = vmatpush1.msra.mxu0 0.0
      %660 = vmatprep.mubr.f32.mxu0 0.0
      %v661 = vand.u32 %v219, 4294901760
      %662 = vmatmul.mubr.f32.gmra.mrb[0].mxu0 %v661
      %v663 = vpop.f32.mrb[0].mxu0
      %v664 = vadd.f32 %v592, %v663
      %v665 = vpop.f32.mrb[0].mxu0
      %666 = vdwg.mxu0
      %v668 = vsel %vm217, %v208, 0
      %670 = vmatprep.subr.mxu0 0.0
      %v671 = vand.u32 %v207, 4294901760
      %672 = vmatpush1.msra.mxu0 %v671
      %673 = vmatprep.subr.mxu0 0.0
      %674 = vmatpush1.msra.mxu0 0.0
      %675 = vmatprep.subr.mxu0 0.0
      %676 = vmatpush1.msra.mxu0 0.0
      %677 = vmatprep.subr.mxu0 0.0
      %678 = vmatpush1.msra.mxu0 0.0
      %679 = vmatprep.subr.mxu0 0.0
      %680 = vmatpush1.msra.mxu0 0.0
      %681 = vmatprep.subr.mxu0 0.0
      %682 = vmatpush1.msra.mxu0 0.0
      %683 = vmatprep.subr.mxu0 0.0
      %684 = vmatpush1.msra.mxu0 0.0
      %685 = vmatprep.subr.mxu0 0.0
      %686 = vmatpush1.msra.mxu0 0.0
      %687 = vmatprep.subr.mxu0 0.0
      %688 = vmatpush1.msra.mxu0 0.0
      %689 = vmatprep.subr.mxu0 0.0
      %690 = vmatpush1.msra.mxu0 0.0
      %691 = vmatprep.subr.mxu0 0.0
      %692 = vmatpush1.msra.mxu0 0.0
      %693 = vmatprep.subr.mxu0 0.0
      %694 = vmatpush1.msra.mxu0 0.0
      %695 = vmatprep.subr.mxu0 0.0
      %696 = vmatpush1.msra.mxu0 0.0
      %697 = vmatprep.subr.mxu0 0.0
      %698 = vmatpush1.msra.mxu0 0.0
      %699 = vmatprep.subr.mxu0 0.0
      %700 = vmatpush1.msra.mxu0 0.0
      %701 = vmatprep.subr.mxu0 0.0
      %702 = vmatpush1.msra.mxu0 0.0
      %703 = vmatprep.subr.mxu0 0.0
      %704 = vmatpush1.msra.mxu0 0.0
      %705 = vmatprep.subr.mxu0 0.0
      %706 = vmatpush1.msra.mxu0 0.0
      %707 = vmatprep.subr.mxu0 0.0
      %708 = vmatpush1.msra.mxu0 0.0
      %709 = vmatprep.subr.mxu0 0.0
      %710 = vmatpush1.msra.mxu0 0.0
      %711 = vmatprep.subr.mxu0 0.0
      %712 = vmatpush1.msra.mxu0 0.0
      %713 = vmatprep.subr.mxu0 0.0
      %714 = vmatpush1.msra.mxu0 0.0
      %715 = vmatprep.subr.mxu0 0.0
      %716 = vmatpush1.msra.mxu0 0.0
      %717 = vmatprep.subr.mxu0 0.0
      %718 = vmatpush1.msra.mxu0 0.0
      %719 = vmatprep.subr.mxu0 0.0
      %720 = vmatpush1.msra.mxu0 0.0
      %721 = vmatprep.subr.mxu0 0.0
      %722 = vmatpush1.msra.mxu0 0.0
      %723 = vmatprep.subr.mxu0 0.0
      %724 = vmatpush1.msra.mxu0 0.0
      %725 = vmatprep.subr.mxu0 0.0
      %726 = vmatpush1.msra.mxu0 0.0
      %727 = vmatprep.subr.mxu0 0.0
      %728 = vmatpush1.msra.mxu0 0.0
      %729 = vmatprep.subr.mxu0 0.0
      %730 = vmatpush1.msra.mxu0 0.0
      %731 = vmatprep.subr.mxu0 0.0
      %732 = vmatpush1.msra.mxu0 0.0
      %733 = vmatprep.subr.mxu0 0.0
      %734 = vmatpush1.msra.mxu0 0.0
      %735 = vmatprep.mubr.f32.mxu0 0.0
      %v736 = vand.u32 %v668, 4294901760
      %v737 = vsub.f32 %v668, %v736
      %v738 = vand.u32 %v737, 4294901760
      %v739 = vsub.f32 %v737, %v738
      %v740 = vand.u32 %v739, 4294901760
      %741 = vmatmul.mubr.f32.gmra.mrb[0].mxu0 %v740
      %v742 = vpop.f32.mrb[0].mxu0
      %v743 = vadd.f32 %v664, %v742
      %v744 = vpop.f32.mrb[0].mxu0
      %745 = vdwg.mxu0
      %746 = vmatprep.subr.mxu0 0.0
      %v747 = vand.u32 %v207, 4294901760
      %v748 = vsub.f32 %v207, %v747
      %v749 = vand.u32 %v748, 4294901760
      %v750 = vsub.f32 %v748, %v749
      %v751 = vand.u32 %v750, 4294901760
      %752 = vmatpush1.msra.mxu0 %v751
      %753 = vmatprep.subr.mxu0 0.0
      %754 = vmatpush1.msra.mxu0 0.0
      %755 = vmatprep.subr.mxu0 0.0
      %756 = vmatpush1.msra.mxu0 0.0
      %757 = vmatprep.subr.mxu0 0.0
      %758 = vmatpush1.msra.mxu0 0.0
      %759 = vmatprep.subr.mxu0 0.0
      %760 = vmatpush1.msra.mxu0 0.0
      %761 = vmatprep.subr.mxu0 0.0
      %762 = vmatpush1.msra.mxu0 0.0
      %763 = vmatprep.subr.mxu0 0.0
      %764 = vmatpush1.msra.mxu0 0.0
      %765 = vmatprep.subr.mxu0 0.0
      %766 = vmatpush1.msra.mxu0 0.0
      %767 = vmatprep.subr.mxu0 0.0
      %768 = vmatpush1.msra.mxu0 0.0
      %769 = vmatprep.subr.mxu0 0.0
      %770 = vmatpush1.msra.mxu0 0.0
      %771 = vmatprep.subr.mxu0 0.0
      %772 = vmatpush1.msra.mxu0 0.0
      %773 = vmatprep.subr.mxu0 0.0
      %774 = vmatpush1.msra.mxu0 0.0
      %775 = vmatprep.subr.mxu0 0.0
      %776 = vmatpush1.msra.mxu0 0.0
      %777 = vmatprep.subr.mxu0 0.0
      %778 = vmatpush1.msra.mxu0 0.0
      %779 = vmatprep.subr.mxu0 0.0
      %780 = vmatpush1.msra.mxu0 0.0
      %781 = vmatprep.subr.mxu0 0.0
      %782 = vmatpush1.msra.mxu0 0.0
      %783 = vmatprep.subr.mxu0 0.0
      %784 = vmatpush1.msra.mxu0 0.0
      %785 = vmatprep.subr.mxu0 0.0
      %786 = vmatpush1.msra.mxu0 0.0
      %787 = vmatprep.subr.mxu0 0.0
      %788 = vmatpush1.msra.mxu0 0.0
      %789 = vmatprep.subr.mxu0 0.0
      %790 = vmatpush1.msra.mxu0 0.0
      %791 = vmatprep.subr.mxu0 0.0
      %792 = vmatpush1.msra.mxu0 0.0
      %793 = vmatprep.subr.mxu0 0.0
      %794 = vmatpush1.msra.mxu0 0.0
      %795 = vmatprep.subr.mxu0 0.0
      %796 = vmatpush1.msra.mxu0 0.0
      %797 = vmatprep.subr.mxu0 0.0
      %798 = vmatpush1.msra.mxu0 0.0
      %799 = vmatprep.subr.mxu0 0.0
      %800 = vmatpush1.msra.mxu0 0.0
      %801 = vmatprep.subr.mxu0 0.0
      %802 = vmatpush1.msra.mxu0 0.0
      %803 = vmatprep.subr.mxu0 0.0
      %804 = vmatpush1.msra.mxu0 0.0
      %805 = vmatprep.subr.mxu0 0.0
      %806 = vmatpush1.msra.mxu0 0.0
      %807 = vmatprep.subr.mxu0 0.0
      %808 = vmatpush1.msra.mxu0 0.0
      %809 = vmatprep.subr.mxu0 0.0
      %810 = vmatpush1.msra.mxu0 0.0
      %811 = vmatprep.subr.mxu0 0.0
      %812 = vmatpush1.msra.mxu0 0.0
      %813 = vmatprep.subr.mxu0 0.0
      %814 = vmatpush1.msra.mxu0 0.0
      %815 = vmatprep.mubr.f32.mxu0 0.0
      %v816 = vand.u32 %v668, 4294901760
      %817 = vmatmul.mubr.f32.gmra.mrb[0].mxu0 %v816
      %v818 = vpop.f32.mrb[0].mxu0
      %v819 = vadd.f32 %v743, %v818
      %v820 = vpop.f32.mrb[0].mxu0
      %821 = vdwg.mxu0
      %822 = vmatprep.subr.mxu0 0.0
      %v823 = vand.u32 %v207, 4294901760
      %v824 = vsub.f32 %v207, %v823
      %825 = vmatpush1.msra.mxu0 %v824
      %826 = vmatprep.subr.mxu0 0.0
      %827 = vmatpush1.msra.mxu0 0.0
      %828 = vmatprep.subr.mxu0 0.0
      %829 = vmatpush1.msra.mxu0 0.0
      %830 = vmatprep.subr.mxu0 0.0
      %831 = vmatpush1.msra.mxu0 0.0
      %832 = vmatprep.subr.mxu0 0.0
      %833 = vmatpush1.msra.mxu0 0.0
      %834 = vmatprep.subr.mxu0 0.0
      %835 = vmatpush1.msra.mxu0 0.0
      %836 = vmatprep.subr.mxu0 0.0
      %837 = vmatpush1.msra.mxu0 0.0
      %838 = vmatprep.subr.mxu0 0.0
      %839 = vmatpush1.msra.mxu0 0.0
      %840 = vmatprep.subr.mxu0 0.0
      %841 = vmatpush1.msra.mxu0 0.0
      %842 = vmatprep.subr.mxu0 0.0
      %843 = vmatpush1.msra.mxu0 0.0
      %844 = vmatprep.subr.mxu0 0.0
      %845 = vmatpush1.msra.mxu0 0.0
      %846 = vmatprep.subr.mxu0 0.0
      %847 = vmatpush1.msra.mxu0 0.0
      %848 = vmatprep.subr.mxu0 0.0
      %849 = vmatpush1.msra.mxu0 0.0
      %850 = vmatprep.subr.mxu0 0.0
      %851 = vmatpush1.msra.mxu0 0.0
      %852 = vmatprep.subr.mxu0 0.0
      %853 = vmatpush1.msra.mxu0 0.0
      %854 = vmatprep.subr.mxu0 0.0
      %855 = vmatpush1.msra.mxu0 0.0
      %856 = vmatprep.subr.mxu0 0.0
      %857 = vmatpush1.msra.mxu0 0.0
      %858 = vmatprep.subr.mxu0 0.0
      %859 = vmatpush1.msra.mxu0 0.0
      %860 = vmatprep.subr.mxu0 0.0
      %861 = vmatpush1.msra.mxu0 0.0
      %862 = vmatprep.subr.mxu0 0.0
      %863 = vmatpush1.msra.mxu0 0.0
      %864 = vmatprep.subr.mxu0 0.0
      %865 = vmatpush1.msra.mxu0 0.0
      %866 = vmatprep.subr.mxu0 0.0
      %867 = vmatpush1.msra.mxu0 0.0
      %868 = vmatprep.subr.mxu0 0.0
      %869 = vmatpush1.msra.mxu0 0.0
      %870 = vmatprep.subr.mxu0 0.0
      %871 = vmatpush1.msra.mxu0 0.0
      %872 = vmatprep.subr.mxu0 0.0
      %873 = vmatpush1.msra.mxu0 0.0
      %874 = vmatprep.subr.mxu0 0.0
      %875 = vmatpush1.msra.mxu0 0.0
      %876 = vmatprep.subr.mxu0 0.0
      %877 = vmatpush1.msra.mxu0 0.0
      %878 = vmatprep.subr.mxu0 0.0
      %879 = vmatpush1.msra.mxu0 0.0
      %880 = vmatprep.subr.mxu0 0.0
      %881 = vmatpush1.msra.mxu0 0.0
      %882 = vmatprep.subr.mxu0 0.0
      %883 = vmatpush1.msra.mxu0 0.0
      %884 = vmatprep.subr.mxu0 0.0
      %885 = vmatpush1.msra.mxu0 0.0
      %886 = vmatprep.subr.mxu0 0.0
      %887 = vmatpush1.msra.mxu0 0.0
      %888 = vmatprep.mubr.f32.mxu0 0.0
      %v889 = vand.u32 %v668, 4294901760
      %v890 = vsub.f32 %v668, %v889
      %891 = vmatmul.mubr.f32.gmra.mrb[0].mxu0 %v890
      %v892 = vpop.f32.mrb[0].mxu0
      %v893 = vadd.f32 %v819, %v892
      %v894 = vpop.f32.mrb[0].mxu0
      %895 = vdwg.mxu0
      %896 = vmatprep.subr.mxu0 0.0
      %v897 = vand.u32 %v207, 4294901760
      %898 = vmatpush1.msra.mxu0 %v897
      %899 = vmatprep.subr.mxu0 0.0
      %900 = vmatpush1.msra.mxu0 0.0
      %901 = vmatprep.subr.mxu0 0.0
      %902 = vmatpush1.msra.mxu0 0.0
      %903 = vmatprep.subr.mxu0 0.0
      %904 = vmatpush1.msra.mxu0 0.0
      %905 = vmatprep.subr.mxu0 0.0
      %906 = vmatpush1.msra.mxu0 0.0
      %907 = vmatprep.subr.mxu0 0.0
      %908 = vmatpush1.msra.mxu0 0.0
      %909 = vmatprep.subr.mxu0 0.0
      %910 = vmatpush1.msra.mxu0 0.0
      %911 = vmatprep.subr.mxu0 0.0
      %912 = vmatpush1.msra.mxu0 0.0
      %913 = vmatprep.subr.mxu0 0.0
      %914 = vmatpush1.msra.mxu0 0.0
      %915 = vmatprep.subr.mxu0 0.0
      %916 = vmatpush1.msra.mxu0 0.0
      %917 = vmatprep.subr.mxu0 0.0
      %918 = vmatpush1.msra.mxu0 0.0
      %919 = vmatprep.subr.mxu0 0.0
      %920 = vmatpush1.msra.mxu0 0.0
      %921 = vmatprep.subr.mxu0 0.0
      %922 = vmatpush1.msra.mxu0 0.0
      %923 = vmatprep.subr.mxu0 0.0
      %924 = vmatpush1.msra.mxu0 0.0
      %925 = vmatprep.subr.mxu0 0.0
      %926 = vmatpush1.msra.mxu0 0.0
      %927 = vmatprep.subr.mxu0 0.0
      %928 = vmatpush1.msra.mxu0 0.0
      %929 = vmatprep.subr.mxu0 0.0
      %930 = vmatpush1.msra.mxu0 0.0
      %931 = vmatprep.subr.mxu0 0.0
      %932 = vmatpush1.msra.mxu0 0.0
      %933 = vmatprep.subr.mxu0 0.0
      %934 = vmatpush1.msra.mxu0 0.0
      %935 = vmatprep.subr.mxu0 0.0
      %936 = vmatpush1.msra.mxu0 0.0
      %937 = vmatprep.subr.mxu0 0.0
      %938 = vmatpush1.msra.mxu0 0.0
      %939 = vmatprep.subr.mxu0 0.0
      %940 = vmatpush1.msra.mxu0 0.0
      %941 = vmatprep.subr.mxu0 0.0
      %942 = vmatpush1.msra.mxu0 0.0
      %943 = vmatprep.subr.mxu0 0.0
      %944 = vmatpush1.msra.mxu0 0.0
      %945 = vmatprep.subr.mxu0 0.0
      %946 = vmatpush1.msra.mxu0 0.0
      %947 = vmatprep.subr.mxu0 0.0
      %948 = vmatpush1.msra.mxu0 0.0
      %949 = vmatprep.subr.mxu0 0.0
      %950 = vmatpush1.msra.mxu0 0.0
      %951 = vmatprep.subr.mxu0 0.0
      %952 = vmatpush1.msra.mxu0 0.0
      %953 = vmatprep.subr.mxu0 0.0
      %954 = vmatpush1.msra.mxu0 0.0
      %955 = vmatprep.subr.mxu0 0.0
      %956 = vmatpush1.msra.mxu0 0.0
      %957 = vmatprep.subr.mxu0 0.0
      %958 = vmatpush1.msra.mxu0 0.0
      %959 = vmatprep.subr.mxu0 0.0
      %960 = vmatpush1.msra.mxu0 0.0
      %961 = vmatprep.mubr.f32.mxu0 0.0
      %v962 = vand.u32 %v668, 4294901760
      %v963 = vsub.f32 %v668, %v962
      %v964 = vand.u32 %v963, 4294901760
      %965 = vmatmul.mubr.f32.gmra.mrb[0].mxu0 %v964
      %v966 = vpop.f32.mrb[0].mxu0
      %v967 = vadd.f32 %v893, %v966
      %v968 = vpop.f32.mrb[0].mxu0
      %969 = vdwg.mxu0
      %970 = vmatprep.subr.mxu0 0.0
      %v971 = vand.u32 %v207, 4294901760
      %v972 = vsub.f32 %v207, %v971
      %v973 = vand.u32 %v972, 4294901760
      %974 = vmatpush1.msra.mxu0 %v973
      %975 = vmatprep.subr.mxu0 0.0
      %976 = vmatpush1.msra.mxu0 0.0
      %977 = vmatprep.subr.mxu0 0.0
      %978 = vmatpush1.msra.mxu0 0.0
      %979 = vmatprep.subr.mxu0 0.0
      %980 = vmatpush1.msra.mxu0 0.0
      %981 = vmatprep.subr.mxu0 0.0
      %982 = vmatpush1.msra.mxu0 0.0
      %983 = vmatprep.subr.mxu0 0.0
      %984 = vmatpush1.msra.mxu0 0.0
      %985 = vmatprep.subr.mxu0 0.0
      %986 = vmatpush1.msra.mxu0 0.0
      %987 = vmatprep.subr.mxu0 0.0
      %988 = vmatpush1.msra.mxu0 0.0
      %989 = vmatprep.subr.mxu0 0.0
      %990 = vmatpush1.msra.mxu0 0.0
      %991 = vmatprep.subr.mxu0 0.0
      %992 = vmatpush1.msra.mxu0 0.0
      %993 = vmatprep.subr.mxu0 0.0
      %994 = vmatpush1.msra.mxu0 0.0
      %995 = vmatprep.subr.mxu0 0.0
      %996 = vmatpush1.msra.mxu0 0.0
      %997 = vmatprep.subr.mxu0 0.0
      %998 = vmatpush1.msra.mxu0 0.0
      %999 = vmatprep.subr.mxu0 0.0
      %1000 = vmatpush1.msra.mxu0 0.0
      %1001 = vmatprep.subr.mxu0 0.0
      %1002 = vmatpush1.msra.mxu0 0.0
      %1003 = vmatprep.subr.mxu0 0.0
      %1004 = vmatpush1.msra.mxu0 0.0
      %1005 = vmatprep.subr.mxu0 0.0
      %1006 = vmatpush1.msra.mxu0 0.0
      %1007 = vmatprep.subr.mxu0 0.0
      %1008 = vmatpush1.msra.mxu0 0.0
      %1009 = vmatprep.subr.mxu0 0.0
      %1010 = vmatpush1.msra.mxu0 0.0
      %1011 = vmatprep.subr.mxu0 0.0
      %1012 = vmatpush1.msra.mxu0 0.0
      %1013 = vmatprep.subr.mxu0 0.0
      %1014 = vmatpush1.msra.mxu0 0.0
      %1015 = vmatprep.subr.mxu0 0.0
      %1016 = vmatpush1.msra.mxu0 0.0
      %1017 = vmatprep.subr.mxu0 0.0
      %1018 = vmatpush1.msra.mxu0 0.0
      %1019 = vmatprep.subr.mxu0 0.0
      %1020 = vmatpush1.msra.mxu0 0.0
      %1021 = vmatprep.subr.mxu0 0.0
      %1022 = vmatpush1.msra.mxu0 0.0
      %1023 = vmatprep.subr.mxu0 0.0
      %1024 = vmatpush1.msra.mxu0 0.0
      %1025 = vmatprep.subr.mxu0 0.0
      %1026 = vmatpush1.msra.mxu0 0.0
      %1027 = vmatprep.subr.mxu0 0.0
      %1028 = vmatpush1.msra.mxu0 0.0
      %1029 = vmatprep.subr.mxu0 0.0
      %1030 = vmatpush1.msra.mxu0 0.0
      %1031 = vmatprep.subr.mxu0 0.0
      %1032 = vmatpush1.msra.mxu0 0.0
      %1033 = vmatprep.subr.mxu0 0.0
      %1034 = vmatpush1.msra.mxu0 0.0
      %1035 = vmatprep.subr.mxu0 0.0
      %1036 = vmatpush1.msra.mxu0 0.0
      %1037 = vmatprep.mubr.f32.mxu0 0.0
      %v1038 = vand.u32 %v668, 4294901760
      %1039 = vmatmul.mubr.f32.gmra.mrb[0].mxu0 %v1038
      %v1040 = vpop.f32.mrb[0].mxu0
      %v1041 = vadd.f32 %v967, %v1040
      %v1042 = vpop.f32.mrb[0].mxu0
      %1043 = vdwg.mxu0
      %1044 = vmatprep.subr.mxu0 0.0
      %v1045 = vand.u32 %v207, 4294901760
      %1046 = vmatpush1.msra.mxu0 %v1045
      %1047 = vmatprep.subr.mxu0 0.0
      %1048 = vmatpush1.msra.mxu0 0.0
      %1049 = vmatprep.subr.mxu0 0.0
      %1050 = vmatpush1.msra.mxu0 0.0
      %1051 = vmatprep.subr.mxu0 0.0
      %1052 = vmatpush1.msra.mxu0 0.0
      %1053 = vmatprep.subr.mxu0 0.0
      %1054 = vmatpush1.msra.mxu0 0.0
      %1055 = vmatprep.subr.mxu0 0.0
      %1056 = vmatpush1.msra.mxu0 0.0
      %1057 = vmatprep.subr.mxu0 0.0
      %1058 = vmatpush1.msra.mxu0 0.0
      %1059 = vmatprep.subr.mxu0 0.0
      %1060 = vmatpush1.msra.mxu0 0.0
      %1061 = vmatprep.subr.mxu0 0.0
      %1062 = vmatpush1.msra.mxu0 0.0
      %1063 = vmatprep.subr.mxu0 0.0
      %1064 = vmatpush1.msra.mxu0 0.0
      %1065 = vmatprep.subr.mxu0 0.0
      %1066 = vmatpush1.msra.mxu0 0.0
      %1067 = vmatprep.subr.mxu0 0.0
      %1068 = vmatpush1.msra.mxu0 0.0
      %1069 = vmatprep.subr.mxu0 0.0
      %1070 = vmatpush1.msra.mxu0 0.0
      %1071 = vmatprep.subr.mxu0 0.0
      %1072 = vmatpush1.msra.mxu0 0.0
      %1073 = vmatprep.subr.mxu0 0.0
      %1074 = vmatpush1.msra.mxu0 0.0
      %1075 = vmatprep.subr.mxu0 0.0
      %1076 = vmatpush1.msra.mxu0 0.0
      %1077 = vmatprep.subr.mxu0 0.0
      %1078 = vmatpush1.msra.mxu0 0.0
      %1079 = vmatprep.subr.mxu0 0.0
      %1080 = vmatpush1.msra.mxu0 0.0
      %1081 = vmatprep.subr.mxu0 0.0
      %1082 = vmatpush1.msra.mxu0 0.0
      %1083 = vmatprep.subr.mxu0 0.0
      %1084 = vmatpush1.msra.mxu0 0.0
      %1085 = vmatprep.subr.mxu0 0.0
      %1086 = vmatpush1.msra.mxu0 0.0
      %1087 = vmatprep.subr.mxu0 0.0
      %1088 = vmatpush1.msra.mxu0 0.0
      %1089 = vmatprep.subr.mxu0 0.0
      %1090 = vmatpush1.msra.mxu0 0.0
      %1091 = vmatprep.subr.mxu0 0.0
      %1092 = vmatpush1.msra.mxu0 0.0
      %1093 = vmatprep.subr.mxu0 0.0
      %1094 = vmatpush1.msra.mxu0 0.0
      %1095 = vmatprep.subr.mxu0 0.0
      %1096 = vmatpush1.msra.mxu0 0.0
      %1097 = vmatprep.subr.mxu0 0.0
      %1098 = vmatpush1.msra.mxu0 0.0
      %1099 = vmatprep.subr.mxu0 0.0
      %1100 = vmatpush1.msra.mxu0 0.0
      %1101 = vmatprep.subr.mxu0 0.0
      %1102 = vmatpush1.msra.mxu0 0.0
      %1103 = vmatprep.subr.mxu0 0.0
      %1104 = vmatpush1.msra.mxu0 0.0
      %1105 = vmatprep.subr.mxu0 0.0
      %1106 = vmatpush1.msra.mxu0 0.0
      %1107 = vmatprep.subr.mxu0 0.0
      %1108 = vmatpush1.msra.mxu0 0.0
      %1109 = vmatprep.mubr.f32.mxu0 0.0
      %v1110 = vand.u32 %v668, 4294901760
      %1111 = vmatmul.mubr.f32.gmra.mrb[0].mxu0 %v1110
      %v1112 = vpop.f32.mrb[0].mxu0
      %v1113 = vadd.f32 %v1041, %v1112
      %v1114 = vpop.f32.mrb[0].mxu0
      %1115 = vdwg.mxu0
      %v1116 = vlaneseq
      %v1117 = vshrl.u32 %v1116, 7
      %v1118 = vsub.s32 2, %v1117
      %v1119 = vrot.slane %v185, %v1118
      %vm1120 = vcmp.eq.s32.totalorder %v1119, %v200
      %v1121 = vsel %vm1120, 1, 0
      %v1122 = vcvt.s32.f32 %v1121
      %v1123 = vld [vmem:[%s171 + $0x2] sm:$0x1]
      %v1125 = vsel %vm217, %v1123, 0
      %1127 = vmatprep.subr.mxu0 0.0
      %v1128 = vand.u32 %v1122, 4294901760
      %1129 = vmatpush1.msra.mxu0 %v1128
      %1130 = vmatprep.subr.mxu0 0.0
      %1131 = vmatpush1.msra.mxu0 0.0
      %1132 = vmatprep.subr.mxu0 0.0
      %1133 = vmatpush1.msra.mxu0 0.0
      %1134 = vmatprep.subr.mxu0 0.0
      %1135 = vmatpush1.msra.mxu0 0.0
      %1136 = vmatprep.subr.mxu0 0.0
      %1137 = vmatpush1.msra.mxu0 0.0
      %1138 = vmatprep.subr.mxu0 0.0
      %1139 = vmatpush1.msra.mxu0 0.0
      %1140 = vmatprep.subr.mxu0 0.0
      %1141 = vmatpush1.msra.mxu0 0.0
      %1142 = vmatprep.subr.mxu0 0.0
      %1143 = vmatpush1.msra.mxu0 0.0
      %1144 = vmatprep.subr.mxu0 0.0
      %1145 = vmatpush1.msra.mxu0 0.0
      %1146 = vmatprep.subr.mxu0 0.0
      %1147 = vmatpush1.msra.mxu0 0.0
      %1148 = vmatprep.subr.mxu0 0.0
      %1149 = vmatpush1.msra.mxu0 0.0
      %1150 = vmatprep.subr.mxu0 0.0
      %1151 = vmatpush1.msra.mxu0 0.0
      %1152 = vmatprep.subr.mxu0 0.0
      %1153 = vmatpush1.msra.mxu0 0.0
      %1154 = vmatprep.subr.mxu0 0.0
      %1155 = vmatpush1.msra.mxu0 0.0
      %1156 = vmatprep.subr.mxu0 0.0
      %1157 = vmatpush1.msra.mxu0 0.0
      %1158 = vmatprep.subr.mxu0 0.0
      %1159 = vmatpush1.msra.mxu0 0.0
      %1160 = vmatprep.subr.mxu0 0.0
      %1161 = vmatpush1.msra.mxu0 0.0
      %1162 = vmatprep.subr.mxu0 0.0
      %1163 = vmatpush1.msra.mxu0 0.0
      %1164 = vmatprep.subr.mxu0 0.0
      %1165 = vmatpush1.msra.mxu0 0.0
      %1166 = vmatprep.subr.mxu0 0.0
      %1167 = vmatpush1.msra.mxu0 0.0
      %1168 = vmatprep.subr.mxu0 0.0
      %1169 = vmatpush1.msra.mxu0 0.0
      %1170 = vmatprep.subr.mxu0 0.0
      %1171 = vmatpush1.msra.mxu0 0.0
      %1172 = vmatprep.subr.mxu0 0.0
      %1173 = vmatpush1.msra.mxu0 0.0
      %1174 = vmatprep.subr.mxu0 0.0
      %1175 = vmatpush1.msra.mxu0 0.0
      %1176 = vmatprep.subr.mxu0 0.0
      %1177 = vmatpush1.msra.mxu0 0.0
      %1178 = vmatprep.subr.mxu0 0.0
      %1179 = vmatpush1.msra.mxu0 0.0
      %1180 = vmatprep.subr.mxu0 0.0
      %1181 = vmatpush1.msra.mxu0 0.0
      %1182 = vmatprep.subr.mxu0 0.0
      %1183 = vmatpush1.msra.mxu0 0.0
      %1184 = vmatprep.subr.mxu0 0.0
      %1185 = vmatpush1.msra.mxu0 0.0
      %1186 = vmatprep.subr.mxu0 0.0
      %1187 = vmatpush1.msra.mxu0 0.0
      %1188 = vmatprep.subr.mxu0 0.0
      %1189 = vmatpush1.msra.mxu0 0.0
      %1190 = vmatprep.subr.mxu0 0.0
      %1191 = vmatpush1.msra.mxu0 0.0
      %1192 = vmatprep.mubr.f32.mxu0 0.0
      %v1193 = vand.u32 %v1125, 4294901760
      %v1194 = vsub.f32 %v1125, %v1193
      %v1195 = vand.u32 %v1194, 4294901760
      %v1196 = vsub.f32 %v1194, %v1195
      %v1197 = vand.u32 %v1196, 4294901760
      %1198 = vmatmul.mubr.f32.gmra.mrb[0].mxu0 %v1197
      %v1199 = vpop.f32.mrb[0].mxu0
      %v1200 = vadd.f32 0.0, %v1199
      %v1201 = vpop.f32.mrb[0].mxu0
      %1202 = vdwg.mxu0
      %1203 = vmatprep.subr.mxu0 0.0
      %v1204 = vand.u32 %v1122, 4294901760
      %v1205 = vsub.f32 %v1122, %v1204
      %v1206 = vand.u32 %v1205, 4294901760
      %v1207 = vsub.f32 %v1205, %v1206
      %v1208 = vand.u32 %v1207, 4294901760
      %1209 = vmatpush1.msra.mxu0 %v1208
      %1210 = vmatprep.subr.mxu0 0.0
      %1211 = vmatpush1.msra.mxu0 0.0
      %1212 = vmatprep.subr.mxu0 0.0
      %1213 = vmatpush1.msra.mxu0 0.0
      %1214 = vmatprep.subr.mxu0 0.0
      %1215 = vmatpush1.msra.mxu0 0.0
      %1216 = vmatprep.subr.mxu0 0.0
      %1217 = vmatpush1.msra.mxu0 0.0
      %1218 = vmatprep.subr.mxu0 0.0
      %1219 = vmatpush1.msra.mxu0 0.0
      %1220 = vmatprep.subr.mxu0 0.0
      %1221 = vmatpush1.msra.mxu0 0.0
      %1222 = vmatprep.subr.mxu0 0.0
      %1223 = vmatpush1.msra.mxu0 0.0
      %1224 = vmatprep.subr.mxu0 0.0
      %1225 = vmatpush1.msra.mxu0 0.0
      %1226 = vmatprep.subr.mxu0 0.0
      %1227 = vmatpush1.msra.mxu0 0.0
      %1228 = vmatprep.subr.mxu0 0.0
      %1229 = vmatpush1.msra.mxu0 0.0
      %1230 = vmatprep.subr.mxu0 0.0
      %1231 = vmatpush1.msra.mxu0 0.0
      %1232 = vmatprep.subr.mxu0 0.0
      %1233 = vmatpush1.msra.mxu0 0.0
      %1234 = vmatprep.subr.mxu0 0.0
      %1235 = vmatpush1.msra.mxu0 0.0
      %1236 = vmatprep.subr.mxu0 0.0
      %1237 = vmatpush1.msra.mxu0 0.0
      %1238 = vmatprep.subr.mxu0 0.0
      %1239 = vmatpush1.msra.mxu0 0.0
      %1240 = vmatprep.subr.mxu0 0.0
      %1241 = vmatpush1.msra.mxu0 0.0
      %1242 = vmatprep.subr.mxu0 0.0
      %1243 = vmatpush1.msra.mxu0 0.0
      %1244 = vmatprep.subr.mxu0 0.0
      %1245 = vmatpush1.msra.mxu0 0.0
      %1246 = vmatprep.subr.mxu0 0.0
      %1247 = vmatpush1.msra.mxu0 0.0
      %1248 = vmatprep.subr.mxu0 0.0
      %1249 = vmatpush1.msra.mxu0 0.0
      %1250 = vmatprep.subr.mxu0 0.0
      %1251 = vmatpush1.msra.mxu0 0.0
      %1252 = vmatprep.subr.mxu0 0.0
      %1253 = vmatpush1.msra.mxu0 0.0
      %1254 = vmatprep.subr.mxu0 0.0
      %1255 = vmatpush1.msra.mxu0 0.0
      %1256 = vmatprep.subr.mxu0 0.0
      %1257 = vmatpush1.msra.mxu0 0.0
      %1258 = vmatprep.subr.mxu0 0.0
      %1259 = vmatpush1.msra.mxu0 0.0
      %1260 = vmatprep.subr.mxu0 0.0
      %1261 = vmatpush1.msra.mxu0 0.0
      %1262 = vmatprep.subr.mxu0 0.0
      %1263 = vmatpush1.msra.mxu0 0.0
      %1264 = vmatprep.subr.mxu0 0.0
      %1265 = vmatpush1.msra.mxu0 0.0
      %1266 = vmatprep.subr.mxu0 0.0
      %1267 = vmatpush1.msra.mxu0 0.0
      %1268 = vmatprep.subr.mxu0 0.0
      %1269 = vmatpush1.msra.mxu0 0.0
      %1270 = vmatprep.subr.mxu0 0.0
      %1271 = vmatpush1.msra.mxu0 0.0
      %1272 = vmatprep.mubr.f32.mxu0 0.0
      %v1273 = vand.u32 %v1125, 4294901760
      %1274 = vmatmul.mubr.f32.gmra.mrb[0].mxu0 %v1273
      %v1275 = vpop.f32.mrb[0].mxu0
      %v1276 = vadd.f32 %v1200, %v1275
      %v1277 = vpop.f32.mrb[0].mxu0
      %1278 = vdwg.mxu0
      %1279 = vmatprep.subr.mxu0 0.0
      %v1280 = vand.u32 %v1122, 4294901760
      %v1281 = vsub.f32 %v1122, %v1280
      %1282 = vmatpush1.msra.mxu0 %v1281
      %1283 = vmatprep.subr.mxu0 0.0
      %1284 = vmatpush1.msra.mxu0 0.0
      %1285 = vmatprep.subr.mxu0 0.0
      %1286 = vmatpush1.msra.mxu0 0.0
      %1287 = vmatprep.subr.mxu0 0.0
      %1288 = vmatpush1.msra.mxu0 0.0
      %1289 = vmatprep.subr.mxu0 0.0
      %1290 = vmatpush1.msra.mxu0 0.0
      %1291 = vmatprep.subr.mxu0 0.0
      %1292 = vmatpush1.msra.mxu0 0.0
      %1293 = vmatprep.subr.mxu0 0.0
      %1294 = vmatpush1.msra.mxu0 0.0
      %1295 = vmatprep.subr.mxu0 0.0
      %1296 = vmatpush1.msra.mxu0 0.0
      %1297 = vmatprep.subr.mxu0 0.0
      %1298 = vmatpush1.msra.mxu0 0.0
      %1299 = vmatprep.subr.mxu0 0.0
      %1300 = vmatpush1.msra.mxu0 0.0
      %1301 = vmatprep.subr.mxu0 0.0
      %1302 = vmatpush1.msra.mxu0 0.0
      %1303 = vmatprep.subr.mxu0 0.0
      %1304 = vmatpush1.msra.mxu0 0.0
      %1305 = vmatprep.subr.mxu0 0.0
      %1306 = vmatpush1.msra.mxu0 0.0
      %1307 = vmatprep.subr.mxu0 0.0
      %1308 = vmatpush1.msra.mxu0 0.0
      %1309 = vmatprep.subr.mxu0 0.0
      %1310 = vmatpush1.msra.mxu0 0.0
      %1311 = vmatprep.subr.mxu0 0.0
      %1312 = vmatpush1.msra.mxu0 0.0
      %1313 = vmatprep.subr.mxu0 0.0
      %1314 = vmatpush1.msra.mxu0 0.0
      %1315 = vmatprep.subr.mxu0 0.0
      %1316 = vmatpush1.msra.mxu0 0.0
      %1317 = vmatprep.subr.mxu0 0.0
      %1318 = vmatpush1.msra.mxu0 0.0
      %1319 = vmatprep.subr.mxu0 0.0
      %1320 = vmatpush1.msra.mxu0 0.0
      %1321 = vmatprep.subr.mxu0 0.0
      %1322 = vmatpush1.msra.mxu0 0.0
      %1323 = vmatprep.subr.mxu0 0.0
      %1324 = vmatpush1.msra.mxu0 0.0
      %1325 = vmatprep.subr.mxu0 0.0
      %1326 = vmatpush1.msra.mxu0 0.0
      %1327 = vmatprep.subr.mxu0 0.0
      %1328 = vmatpush1.msra.mxu0 0.0
      %1329 = vmatprep.subr.mxu0 0.0
      %1330 = vmatpush1.msra.mxu0 0.0
      %1331 = vmatprep.subr.mxu0 0.0
      %1332 = vmatpush1.msra.mxu0 0.0
      %1333 = vmatprep.subr.mxu0 0.0
      %1334 = vmatpush1.msra.mxu0 0.0
      %1335 = vmatprep.subr.mxu0 0.0
      %1336 = vmatpush1.msra.mxu0 0.0
      %1337 = vmatprep.subr.mxu0 0.0
      %1338 = vmatpush1.msra.mxu0 0.0
      %1339 = vmatprep.subr.mxu0 0.0
      %1340 = vmatpush1.msra.mxu0 0.0
      %1341 = vmatprep.subr.mxu0 0.0
      %1342 = vmatpush1.msra.mxu0 0.0
      %1343 = vmatprep.subr.mxu0 0.0
      %1344 = vmatpush1.msra.mxu0 0.0
      %1345 = vmatprep.mubr.f32.mxu0 0.0
      %v1346 = vand.u32 %v1125, 4294901760
      %v1347 = vsub.f32 %v1125, %v1346
      %1348 = vmatmul.mubr.f32.gmra.mrb[0].mxu0 %v1347
      %v1349 = vpop.f32.mrb[0].mxu0
      %v1350 = vadd.f32 %v1276, %v1349
      %v1351 = vpop.f32.mrb[0].mxu0
      %1352 = vdwg.mxu0
      %1353 = vmatprep.subr.mxu0 0.0
      %v1354 = vand.u32 %v1122, 4294901760
      %1355 = vmatpush1.msra.mxu0 %v1354
      %1356 = vmatprep.subr.mxu0 0.0
      %1357 = vmatpush1.msra.mxu0 0.0
      %1358 = vmatprep.subr.mxu0 0.0
      %1359 = vmatpush1.msra.mxu0 0.0
      %1360 = vmatprep.subr.mxu0 0.0
      %1361 = vmatpush1.msra.mxu0 0.0
      %1362 = vmatprep.subr.mxu0 0.0
      %1363 = vmatpush1.msra.mxu0 0.0
      %1364 = vmatprep.subr.mxu0 0.0
      %1365 = vmatpush1.msra.mxu0 0.0
      %1366 = vmatprep.subr.mxu0 0.0
      %1367 = vmatpush1.msra.mxu0 0.0
      %1368 = vmatprep.subr.mxu0 0.0
      %1369 = vmatpush1.msra.mxu0 0.0
      %1370 = vmatprep.subr.mxu0 0.0
      %1371 = vmatpush1.msra.mxu0 0.0
      %1372 = vmatprep.subr.mxu0 0.0
      %1373 = vmatpush1.msra.mxu0 0.0
      %1374 = vmatprep.subr.mxu0 0.0
      %1375 = vmatpush1.msra.mxu0 0.0
      %1376 = vmatprep.subr.mxu0 0.0
      %1377 = vmatpush1.msra.mxu0 0.0
      %1378 = vmatprep.subr.mxu0 0.0
      %1379 = vmatpush1.msra.mxu0 0.0
      %1380 = vmatprep.subr.mxu0 0.0
      %1381 = vmatpush1.msra.mxu0 0.0
      %1382 = vmatprep.subr.mxu0 0.0
      %1383 = vmatpush1.msra.mxu0 0.0
      %1384 = vmatprep.subr.mxu0 0.0
      %1385 = vmatpush1.msra.mxu0 0.0
      %1386 = vmatprep.subr.mxu0 0.0
      %1387 = vmatpush1.msra.mxu0 0.0
      %1388 = vmatprep.subr.mxu0 0.0
      %1389 = vmatpush1.msra.mxu0 0.0
      %1390 = vmatprep.subr.mxu0 0.0
      %1391 = vmatpush1.msra.mxu0 0.0
      %1392 = vmatprep.subr.mxu0 0.0
      %1393 = vmatpush1.msra.mxu0 0.0
      %1394 = vmatprep.subr.mxu0 0.0
      %1395 = vmatpush1.msra.mxu0 0.0
      %1396 = vmatprep.subr.mxu0 0.0
      %1397 = vmatpush1.msra.mxu0 0.0
      %1398 = vmatprep.subr.mxu0 0.0
      %1399 = vmatpush1.msra.mxu0 0.0
      %1400 = vmatprep.subr.mxu0 0.0
      %1401 = vmatpush1.msra.mxu0 0.0
      %1402 = vmatprep.subr.mxu0 0.0
      %1403 = vmatpush1.msra.mxu0 0.0
      %1404 = vmatprep.subr.mxu0 0.0
      %1405 = vmatpush1.msra.mxu0 0.0
      %1406 = vmatprep.subr.mxu0 0.0
      %1407 = vmatpush1.msra.mxu0 0.0
      %1408 = vmatprep.subr.mxu0 0.0
      %1409 = vmatpush1.msra.mxu0 0.0
      %1410 = vmatprep.subr.mxu0 0.0
      %1411 = vmatpush1.msra.mxu0 0.0
      %1412 = vmatprep.subr.mxu0 0.0
      %1413 = vmatpush1.msra.mxu0 0.0
      %1414 = vmatprep.subr.mxu0 0.0
      %1415 = vmatpush1.msra.mxu0 0.0
      %1416 = vmatprep.subr.mxu0 0.0
      %1417 = vmatpush1.msra.mxu0 0.0
      %1418 = vmatprep.mubr.f32.mxu0 0.0
      %v1419 = vand.u32 %v1125, 4294901760
      %v1420 = vsub.f32 %v1125, %v1419
      %v1421 = vand.u32 %v1420, 4294901760
      %1422 = vmatmul.mubr.f32.gmra.mrb[0].mxu0 %v1421
      %v1423 = vpop.f32.mrb[0].mxu0
      %v1424 = vadd.f32 %v1350, %v1423
      %v1425 = vpop.f32.mrb[0].mxu0
      %1426 = vdwg.mxu0
      %1427 = vmatprep.subr.mxu0 0.0
      %v1428 = vand.u32 %v1122, 4294901760
      %v1429 = vsub.f32 %v1122, %v1428
      %v1430 = vand.u32 %v1429, 4294901760
      %1431 = vmatpush1.msra.mxu0 %v1430
      %1432 = vmatprep.subr.mxu0 0.0
      %1433 = vmatpush1.msra.mxu0 0.0
      %1434 = vmatprep.subr.mxu0 0.0
      %1435 = vmatpush1.msra.mxu0 0.0
      %1436 = vmatprep.subr.mxu0 0.0
      %1437 = vmatpush1.msra.mxu0 0.0
      %1438 = vmatprep.subr.mxu0 0.0
      %1439 = vmatpush1.msra.mxu0 0.0
      %1440 = vmatprep.subr.mxu0 0.0
      %1441 = vmatpush1.msra.mxu0 0.0
      %1442 = vmatprep.subr.mxu0 0.0
      %1443 = vmatpush1.msra.mxu0 0.0
      %1444 = vmatprep.subr.mxu0 0.0
      %1445 = vmatpush1.msra.mxu0 0.0
      %1446 = vmatprep.subr.mxu0 0.0
      %1447 = vmatpush1.msra.mxu0 0.0
      %1448 = vmatprep.subr.mxu0 0.0
      %1449 = vmatpush1.msra.mxu0 0.0
      %1450 = vmatprep.subr.mxu0 0.0
      %1451 = vmatpush1.msra.mxu0 0.0
      %1452 = vmatprep.subr.mxu0 0.0
      %1453 = vmatpush1.msra.mxu0 0.0
      %1454 = vmatprep.subr.mxu0 0.0
      %1455 = vmatpush1.msra.mxu0 0.0
      %1456 = vmatprep.subr.mxu0 0.0
      %1457 = vmatpush1.msra.mxu0 0.0
      %1458 = vmatprep.subr.mxu0 0.0
      %1459 = vmatpush1.msra.mxu0 0.0
      %1460 = vmatprep.subr.mxu0 0.0
      %1461 = vmatpush1.msra.mxu0 0.0
      %1462 = vmatprep.subr.mxu0 0.0
      %1463 = vmatpush1.msra.mxu0 0.0
      %1464 = vmatprep.subr.mxu0 0.0
      %1465 = vmatpush1.msra.mxu0 0.0
      %1466 = vmatprep.subr.mxu0 0.0
      %1467 = vmatpush1.msra.mxu0 0.0
      %1468 = vmatprep.subr.mxu0 0.0
      %1469 = vmatpush1.msra.mxu0 0.0
      %1470 = vmatprep.subr.mxu0 0.0
      %1471 = vmatpush1.msra.mxu0 0.0
      %1472 = vmatprep.subr.mxu0 0.0
      %1473 = vmatpush1.msra.mxu0 0.0
      %1474 = vmatprep.subr.mxu0 0.0
      %1475 = vmatpush1.msra.mxu0 0.0
      %1476 = vmatprep.subr.mxu0 0.0
      %1477 = vmatpush1.msra.mxu0 0.0
      %1478 = vmatprep.subr.mxu0 0.0
      %1479 = vmatpush1.msra.mxu0 0.0
      %1480 = vmatprep.subr.mxu0 0.0
      %1481 = vmatpush1.msra.mxu0 0.0
      %1482 = vmatprep.subr.mxu0 0.0
      %1483 = vmatpush1.msra.mxu0 0.0
      %1484 = vmatprep.subr.mxu0 0.0
      %1485 = vmatpush1.msra.mxu0 0.0
      %1486 = vmatprep.subr.mxu0 0.0
      %1487 = vmatpush1.msra.mxu0 0.0
      %1488 = vmatprep.subr.mxu0 0.0
      %1489 = vmatpush1.msra.mxu0 0.0
      %1490 = vmatprep.subr.mxu0 0.0
      %1491 = vmatpush1.msra.mxu0 0.0
      %1492 = vmatprep.subr.mxu0 0.0
      %1493 = vmatpush1.msra.mxu0 0.0
      %1494 = vmatprep.mubr.f32.mxu0 0.0
      %v1495 = vand.u32 %v1125, 4294901760
      %1496 = vmatmul.mubr.f32.gmra.mrb[0].mxu0 %v1495
      %v1497 = vpop.f32.mrb[0].mxu0
      %v1498 = vadd.f32 %v1424, %v1497
      %v1499 = vpop.f32.mrb[0].mxu0
      %1500 = vdwg.mxu0
      %1501 = vmatprep.subr.mxu0 0.0
      %v1502 = vand.u32 %v1122, 4294901760
      %1503 = vmatpush1.msra.mxu0 %v1502
      %1504 = vmatprep.subr.mxu0 0.0
      %1505 = vmatpush1.msra.mxu0 0.0
      %1506 = vmatprep.subr.mxu0 0.0
      %1507 = vmatpush1.msra.mxu0 0.0
      %1508 = vmatprep.subr.mxu0 0.0
      %1509 = vmatpush1.msra.mxu0 0.0
      %1510 = vmatprep.subr.mxu0 0.0
      %1511 = vmatpush1.msra.mxu0 0.0
      %1512 = vmatprep.subr.mxu0 0.0
      %1513 = vmatpush1.msra.mxu0 0.0
      %1514 = vmatprep.subr.mxu0 0.0
      %1515 = vmatpush1.msra.mxu0 0.0
      %1516 = vmatprep.subr.mxu0 0.0
      %1517 = vmatpush1.msra.mxu0 0.0
      %1518 = vmatprep.subr.mxu0 0.0
      %1519 = vmatpush1.msra.mxu0 0.0
      %1520 = vmatprep.subr.mxu0 0.0
      %1521 = vmatpush1.msra.mxu0 0.0
      %1522 = vmatprep.subr.mxu0 0.0
      %1523 = vmatpush1.msra.mxu0 0.0
      %1524 = vmatprep.subr.mxu0 0.0
      %1525 = vmatpush1.msra.mxu0 0.0
      %1526 = vmatprep.subr.mxu0 0.0
      %1527 = vmatpush1.msra.mxu0 0.0
      %1528 = vmatprep.subr.mxu0 0.0
      %1529 = vmatpush1.msra.mxu0 0.0
      %1530 = vmatprep.subr.mxu0 0.0
      %1531 = vmatpush1.msra.mxu0 0.0
      %1532 = vmatprep.subr.mxu0 0.0
      %1533 = vmatpush1.msra.mxu0 0.0
      %1534 = vmatprep.subr.mxu0 0.0
      %1535 = vmatpush1.msra.mxu0 0.0
      %1536 = vmatprep.subr.mxu0 0.0
      %1537 = vmatpush1.msra.mxu0 0.0
      %1538 = vmatprep.subr.mxu0 0.0
      %1539 = vmatpush1.msra.mxu0 0.0
      %1540 = vmatprep.subr.mxu0 0.0
      %1541 = vmatpush1.msra.mxu0 0.0
      %1542 = vmatprep.subr.mxu0 0.0
      %1543 = vmatpush1.msra.mxu0 0.0
      %1544 = vmatprep.subr.mxu0 0.0
      %1545 = vmatpush1.msra.mxu0 0.0
      %1546 = vmatprep.subr.mxu0 0.0
      %1547 = vmatpush1.msra.mxu0 0.0
      %1548 = vmatprep.subr.mxu0 0.0
      %1549 = vmatpush1.msra.mxu0 0.0
      %1550 = vmatprep.subr.mxu0 0.0
      %1551 = vmatpush1.msra.mxu0 0.0
      %1552 = vmatprep.subr.mxu0 0.0
      %1553 = vmatpush1.msra.mxu0 0.0
      %1554 = vmatprep.subr.mxu0 0.0
      %1555 = vmatpush1.msra.mxu0 0.0
      %1556 = vmatprep.subr.mxu0 0.0
      %1557 = vmatpush1.msra.mxu0 0.0
      %1558 = vmatprep.subr.mxu0 0.0
      %1559 = vmatpush1.msra.mxu0 0.0
      %1560 = vmatprep.subr.mxu0 0.0
      %1561 = vmatpush1.msra.mxu0 0.0
      %1562 = vmatprep.subr.mxu0 0.0
      %1563 = vmatpush1.msra.mxu0 0.0
      %1564 = vmatprep.subr.mxu0 0.0
      %1565 = vmatpush1.msra.mxu0 0.0
      %1566 = vmatprep.mubr.f32.mxu0 0.0
      %v1567 = vand.u32 %v1125, 4294901760
      %1568 = vmatmul.mubr.f32.gmra.mrb[0].mxu0 %v1567
      %v1569 = vpop.f32.mrb[0].mxu0
      %v1570 = vadd.f32 %v1498, %v1569
      %v1571 = vpop.f32.mrb[0].mxu0
      %1572 = vdwg.mxu0
      %v1573 = vadd.f32 %v1113, %v1570
      %v1574 = vlaneseq
      %v1575 = vshrl.u32 %v1574, 7
      %v1576 = vsub.s32 3, %v1575
      %v1577 = vrot.slane %v185, %v1576
      %vm1578 = vcmp.eq.s32.totalorder %v1577, %v200
      %v1579 = vsel %vm1578, 1, 0
      %v1580 = vcvt.s32.f32 %v1579
      %v1581 = vld [vmem:[%s171 + $0x3] sm:$0x1]
      %v1583 = vsel %vm217, %v1581, 0
      %1585 = vmatprep.subr.mxu0 0.0
      %v1586 = vand.u32 %v1580, 4294901760
      %1587 = vmatpush1.msra.mxu0 %v1586
      %1588 = vmatprep.subr.mxu0 0.0
      %1589 = vmatpush1.msra.mxu0 0.0
      %1590 = vmatprep.subr.mxu0 0.0
      %1591 = vmatpush1.msra.mxu0 0.0
      %1592 = vmatprep.subr.mxu0 0.0
      %1593 = vmatpush1.msra.mxu0 0.0
      %1594 = vmatprep.subr.mxu0 0.0
      %1595 = vmatpush1.msra.mxu0 0.0
      %1596 = vmatprep.subr.mxu0 0.0
      %1597 = vmatpush1.msra.mxu0 0.0
      %1598 = vmatprep.subr.mxu0 0.0
      %1599 = vmatpush1.msra.mxu0 0.0
      %1600 = vmatprep.subr.mxu0 0.0
      %1601 = vmatpush1.msra.mxu0 0.0
      %1602 = vmatprep.subr.mxu0 0.0
      %1603 = vmatpush1.msra.mxu0 0.0
      %1604 = vmatprep.subr.mxu0 0.0
      %1605 = vmatpush1.msra.mxu0 0.0
      %1606 = vmatprep.subr.mxu0 0.0
      %1607 = vmatpush1.msra.mxu0 0.0
      %1608 = vmatprep.subr.mxu0 0.0
      %1609 = vmatpush1.msra.mxu0 0.0
      %1610 = vmatprep.subr.mxu0 0.0
      %1611 = vmatpush1.msra.mxu0 0.0
      %1612 = vmatprep.subr.mxu0 0.0
      %1613 = vmatpush1.msra.mxu0 0.0
      %1614 = vmatprep.subr.mxu0 0.0
      %1615 = vmatpush1.msra.mxu0 0.0
      %1616 = vmatprep.subr.mxu0 0.0
      %1617 = vmatpush1.msra.mxu0 0.0
      %1618 = vmatprep.subr.mxu0 0.0
      %1619 = vmatpush1.msra.mxu0 0.0
      %1620 = vmatprep.subr.mxu0 0.0
      %1621 = vmatpush1.msra.mxu0 0.0
      %1622 = vmatprep.subr.mxu0 0.0
      %1623 = vmatpush1.msra.mxu0 0.0
      %1624 = vmatprep.subr.mxu0 0.0
      %1625 = vmatpush1.msra.mxu0 0.0
      %1626 = vmatprep.subr.mxu0 0.0
      %1627 = vmatpush1.msra.mxu0 0.0
      %1628 = vmatprep.subr.mxu0 0.0
      %1629 = vmatpush1.msra.mxu0 0.0
      %1630 = vmatprep.subr.mxu0 0.0
      %1631 = vmatpush1.msra.mxu0 0.0
      %1632 = vmatprep.subr.mxu0 0.0
      %1633 = vmatpush1.msra.mxu0 0.0
      %1634 = vmatprep.subr.mxu0 0.0
      %1635 = vmatpush1.msra.mxu0 0.0
      %1636 = vmatprep.subr.mxu0 0.0
      %1637 = vmatpush1.msra.mxu0 0.0
      %1638 = vmatprep.subr.mxu0 0.0
      %1639 = vmatpush1.msra.mxu0 0.0
      %1640 = vmatprep.subr.mxu0 0.0
      %1641 = vmatpush1.msra.mxu0 0.0
      %1642 = vmatprep.subr.mxu0 0.0
      %1643 = vmatpush1.msra.mxu0 0.0
      %1644 = vmatprep.subr.mxu0 0.0
      %1645 = vmatpush1.msra.mxu0 0.0
      %1646 = vmatprep.subr.mxu0 0.0
      %1647 = vmatpush1.msra.mxu0 0.0
      %1648 = vmatprep.subr.mxu0 0.0
      %1649 = vmatpush1.msra.mxu0 0.0
      %1650 = vmatprep.mubr.f32.mxu0 0.0
      %v1651 = vand.u32 %v1583, 4294901760
      %v1652 = vsub.f32 %v1583, %v1651
      %v1653 = vand.u32 %v1652, 4294901760
      %v1654 = vsub.f32 %v1652, %v1653
      %v1655 = vand.u32 %v1654, 4294901760
      %1656 = vmatmul.mubr.f32.gmra.mrb[0].mxu0 %v1655
      %v1657 = vpop.f32.mrb[0].mxu0
      %v1658 = vadd.f32 0.0, %v1657
      %v1659 = vpop.f32.mrb[0].mxu0
      %1660 = vdwg.mxu0
      %1661 = vmatprep.subr.mxu0 0.0
      %v1662 = vand.u32 %v1580, 4294901760
      %v1663 = vsub.f32 %v1580, %v1662
      %v1664 = vand.u32 %v1663, 4294901760
      %v1665 = vsub.f32 %v1663, %v1664
      %v1666 = vand.u32 %v1665, 4294901760
      %1667 = vmatpush1.msra.mxu0 %v1666
      %1668 = vmatprep.subr.mxu0 0.0
      %1669 = vmatpush1.msra.mxu0 0.0
      %1670 = vmatprep.subr.mxu0 0.0
      %1671 = vmatpush1.msra.mxu0 0.0
      %1672 = vmatprep.subr.mxu0 0.0
      %1673 = vmatpush1.msra.mxu0 0.0
      %1674 = vmatprep.subr.mxu0 0.0
      %1675 = vmatpush1.msra.mxu0 0.0
      %1676 = vmatprep.subr.mxu0 0.0
      %1677 = vmatpush1.msra.mxu0 0.0
      %1678 = vmatprep.subr.mxu0 0.0
      %1679 = vmatpush1.msra.mxu0 0.0
      %1680 = vmatprep.subr.mxu0 0.0
      %1681 = vmatpush1.msra.mxu0 0.0
      %1682 = vmatprep.subr.mxu0 0.0
      %1683 = vmatpush1.msra.mxu0 0.0
      %1684 = vmatprep.subr.mxu0 0.0
      %1685 = vmatpush1.msra.mxu0 0.0
      %1686 = vmatprep.subr.mxu0 0.0
      %1687 = vmatpush1.msra.mxu0 0.0
      %1688 = vmatprep.subr.mxu0 0.0
      %1689 = vmatpush1.msra.mxu0 0.0
      %1690 = vmatprep.subr.mxu0 0.0
      %1691 = vmatpush1.msra.mxu0 0.0
      %1692 = vmatprep.subr.mxu0 0.0
      %1693 = vmatpush1.msra.mxu0 0.0
      %1694 = vmatprep.subr.mxu0 0.0
      %1695 = vmatpush1.msra.mxu0 0.0
      %1696 = vmatprep.subr.mxu0 0.0
      %1697 = vmatpush1.msra.mxu0 0.0
      %1698 = vmatprep.subr.mxu0 0.0
      %1699 = vmatpush1.msra.mxu0 0.0
      %1700 = vmatprep.subr.mxu0 0.0
      %1701 = vmatpush1.msra.mxu0 0.0
      %1702 = vmatprep.subr.mxu0 0.0
      %1703 = vmatpush1.msra.mxu0 0.0
      %1704 = vmatprep.subr.mxu0 0.0
      %1705 = vmatpush1.msra.mxu0 0.0
      %1706 = vmatprep.subr.mxu0 0.0
      %1707 = vmatpush1.msra.mxu0 0.0
      %1708 = vmatprep.subr.mxu0 0.0
      %1709 = vmatpush1.msra.mxu0 0.0
      %1710 = vmatprep.subr.mxu0 0.0
      %1711 = vmatpush1.msra.mxu0 0.0
      %1712 = vmatprep.subr.mxu0 0.0
      %1713 = vmatpush1.msra.mxu0 0.0
      %1714 = vmatprep.subr.mxu0 0.0
      %1715 = vmatpush1.msra.mxu0 0.0
      %1716 = vmatprep.subr.mxu0 0.0
      %1717 = vmatpush1.msra.mxu0 0.0
      %1718 = vmatprep.subr.mxu0 0.0
      %1719 = vmatpush1.msra.mxu0 0.0
      %1720 = vmatprep.subr.mxu0 0.0
      %1721 = vmatpush1.msra.mxu0 0.0
      %1722 = vmatprep.subr.mxu0 0.0
      %1723 = vmatpush1.msra.mxu0 0.0
      %1724 = vmatprep.subr.mxu0 0.0
      %1725 = vmatpush1.msra.mxu0 0.0
      %1726 = vmatprep.subr.mxu0 0.0
      %1727 = vmatpush1.msra.mxu0 0.0
      %1728 = vmatprep.subr.mxu0 0.0
      %1729 = vmatpush1.msra.mxu0 0.0
      %1730 = vmatprep.mubr.f32.mxu0 0.0
      %v1731 = vand.u32 %v1583, 4294901760
      %1732 = vmatmul.mubr.f32.gmra.mrb[0].mxu0 %v1731
      %v1733 = vpop.f32.mrb[0].mxu0
      %v1734 = vadd.f32 %v1658, %v1733
      %v1735 = vpop.f32.mrb[0].mxu0
      %1736 = vdwg.mxu0
      %1737 = vmatprep.subr.mxu0 0.0
      %v1738 = vand.u32 %v1580, 4294901760
      %v1739 = vsub.f32 %v1580, %v1738
      %1740 = vmatpush1.msra.mxu0 %v1739
      %1741 = vmatprep.subr.mxu0 0.0
      %1742 = vmatpush1.msra.mxu0 0.0
      %1743 = vmatprep.subr.mxu0 0.0
      %1744 = vmatpush1.msra.mxu0 0.0
      %1745 = vmatprep.subr.mxu0 0.0
      %1746 = vmatpush1.msra.mxu0 0.0
      %1747 = vmatprep.subr.mxu0 0.0
      %1748 = vmatpush1.msra.mxu0 0.0
      %1749 = vmatprep.subr.mxu0 0.0
      %1750 = vmatpush1.msra.mxu0 0.0
      %1751 = vmatprep.subr.mxu0 0.0
      %1752 = vmatpush1.msra.mxu0 0.0
      %1753 = vmatprep.subr.mxu0 0.0
      %1754 = vmatpush1.msra.mxu0 0.0
      %1755 = vmatprep.subr.mxu0 0.0
      %1756 = vmatpush1.msra.mxu0 0.0
      %1757 = vmatprep.subr.mxu0 0.0
      %1758 = vmatpush1.msra.mxu0 0.0
      %1759 = vmatprep.subr.mxu0 0.0
      %1760 = vmatpush1.msra.mxu0 0.0
      %1761 = vmatprep.subr.mxu0 0.0
      %1762 = vmatpush1.msra.mxu0 0.0
      %1763 = vmatprep.subr.mxu0 0.0
      %1764 = vmatpush1.msra.mxu0 0.0
      %1765 = vmatprep.subr.mxu0 0.0
      %1766 = vmatpush1.msra.mxu0 0.0
      %1767 = vmatprep.subr.mxu0 0.0
      %1768 = vmatpush1.msra.mxu0 0.0
      %1769 = vmatprep.subr.mxu0 0.0
      %1770 = vmatpush1.msra.mxu0 0.0
      %1771 = vmatprep.subr.mxu0 0.0
      %1772 = vmatpush1.msra.mxu0 0.0
      %1773 = vmatprep.subr.mxu0 0.0
      %1774 = vmatpush1.msra.mxu0 0.0
      %1775 = vmatprep.subr.mxu0 0.0
      %1776 = vmatpush1.msra.mxu0 0.0
      %1777 = vmatprep.subr.mxu0 0.0
      %1778 = vmatpush1.msra.mxu0 0.0
      %1779 = vmatprep.subr.mxu0 0.0
      %1780 = vmatpush1.msra.mxu0 0.0
      %1781 = vmatprep.subr.mxu0 0.0
      %1782 = vmatpush1.msra.mxu0 0.0
      %1783 = vmatprep.subr.mxu0 0.0
      %1784 = vmatpush1.msra.mxu0 0.0
      %1785 = vmatprep.subr.mxu0 0.0
      %1786 = vmatpush1.msra.mxu0 0.0
      %1787 = vmatprep.subr.mxu0 0.0
      %1788 = vmatpush1.msra.mxu0 0.0
      %1789 = vmatprep.subr.mxu0 0.0
      %1790 = vmatpush1.msra.mxu0 0.0
      %1791 = vmatprep.subr.mxu0 0.0
      %1792 = vmatpush1.msra.mxu0 0.0
      %1793 = vmatprep.subr.mxu0 0.0
      %1794 = vmatpush1.msra.mxu0 0.0
      %1795 = vmatprep.subr.mxu0 0.0
      %1796 = vmatpush1.msra.mxu0 0.0
      %1797 = vmatprep.subr.mxu0 0.0
      %1798 = vmatpush1.msra.mxu0 0.0
      %1799 = vmatprep.subr.mxu0 0.0
      %1800 = vmatpush1.msra.mxu0 0.0
      %1801 = vmatprep.subr.mxu0 0.0
      %1802 = vmatpush1.msra.mxu0 0.0
      %1803 = vmatprep.mubr.f32.mxu0 0.0
      %v1804 = vand.u32 %v1583, 4294901760
      %v1805 = vsub.f32 %v1583, %v1804
      %1806 = vmatmul.mubr.f32.gmra.mrb[0].mxu0 %v1805
      %v1807 = vpop.f32.mrb[0].mxu0
      %v1808 = vadd.f32 %v1734, %v1807
      %v1809 = vpop.f32.mrb[0].mxu0
      %1810 = vdwg.mxu0
      %1811 = vmatprep.subr.mxu0 0.0
      %v1812 = vand.u32 %v1580, 4294901760
      %1813 = vmatpush1.msra.mxu0 %v1812
      %1814 = vmatprep.subr.mxu0 0.0
      %1815 = vmatpush1.msra.mxu0 0.0
      %1816 = vmatprep.subr.mxu0 0.0
      %1817 = vmatpush1.msra.mxu0 0.0
      %1818 = vmatprep.subr.mxu0 0.0
      %1819 = vmatpush1.msra.mxu0 0.0
      %1820 = vmatprep.subr.mxu0 0.0
      %1821 = vmatpush1.msra.mxu0 0.0
      %1822 = vmatprep.subr.mxu0 0.0
      %1823 = vmatpush1.msra.mxu0 0.0
      %1824 = vmatprep.subr.mxu0 0.0
      %1825 = vmatpush1.msra.mxu0 0.0
      %1826 = vmatprep.subr.mxu0 0.0
      %1827 = vmatpush1.msra.mxu0 0.0
      %1828 = vmatprep.subr.mxu0 0.0
      %1829 = vmatpush1.msra.mxu0 0.0
      %1830 = vmatprep.subr.mxu0 0.0
      %1831 = vmatpush1.msra.mxu0 0.0
      %1832 = vmatprep.subr.mxu0 0.0
      %1833 = vmatpush1.msra.mxu0 0.0
      %1834 = vmatprep.subr.mxu0 0.0
      %1835 = vmatpush1.msra.mxu0 0.0
      %1836 = vmatprep.subr.mxu0 0.0
      %1837 = vmatpush1.msra.mxu0 0.0
      %1838 = vmatprep.subr.mxu0 0.0
      %1839 = vmatpush1.msra.mxu0 0.0
      %1840 = vmatprep.subr.mxu0 0.0
      %1841 = vmatpush1.msra.mxu0 0.0
      %1842 = vmatprep.subr.mxu0 0.0
      %1843 = vmatpush1.msra.mxu0 0.0
      %1844 = vmatprep.subr.mxu0 0.0
      %1845 = vmatpush1.msra.mxu0 0.0
      %1846 = vmatprep.subr.mxu0 0.0
      %1847 = vmatpush1.msra.mxu0 0.0
      %1848 = vmatprep.subr.mxu0 0.0
      %1849 = vmatpush1.msra.mxu0 0.0
      %1850 = vmatprep.subr.mxu0 0.0
      %1851 = vmatpush1.msra.mxu0 0.0
      %1852 = vmatprep.subr.mxu0 0.0
      %1853 = vmatpush1.msra.mxu0 0.0
      %1854 = vmatprep.subr.mxu0 0.0
      %1855 = vmatpush1.msra.mxu0 0.0
      %1856 = vmatprep.subr.mxu0 0.0
      %1857 = vmatpush1.msra.mxu0 0.0
      %1858 = vmatprep.subr.mxu0 0.0
      %1859 = vmatpush1.msra.mxu0 0.0
      %1860 = vmatprep.subr.mxu0 0.0
      %1861 = vmatpush1.msra.mxu0 0.0
      %1862 = vmatprep.subr.mxu0 0.0
      %1863 = vmatpush1.msra.mxu0 0.0
      %1864 = vmatprep.subr.mxu0 0.0
      %1865 = vmatpush1.msra.mxu0 0.0
      %1866 = vmatprep.subr.mxu0 0.0
      %1867 = vmatpush1.msra.mxu0 0.0
      %1868 = vmatprep.subr.mxu0 0.0
      %1869 = vmatpush1.msra.mxu0 0.0
      %1870 = vmatprep.subr.mxu0 0.0
      %1871 = vmatpush1.msra.mxu0 0.0
      %1872 = vmatprep.subr.mxu0 0.0
      %1873 = vmatpush1.msra.mxu0 0.0
      %1874 = vmatprep.subr.mxu0 0.0
      %1875 = vmatpush1.msra.mxu0 0.0
      %1876 = vmatprep.mubr.f32.mxu0 0.0
      %v1877 = vand.u32 %v1583, 4294901760
      %v1878 = vsub.f32 %v1583, %v1877
      %v1879 = vand.u32 %v1878, 4294901760
      %1880 = vmatmul.mubr.f32.gmra.mrb[0].mxu0 %v1879
      %v1881 = vpop.f32.mrb[0].mxu0
      %v1882 = vadd.f32 %v1808, %v1881
      %v1883 = vpop.f32.mrb[0].mxu0
      %1884 = vdwg.mxu0
      %1885 = vmatprep.subr.mxu0 0.0
      %v1886 = vand.u32 %v1580, 4294901760
      %v1887 = vsub.f32 %v1580, %v1886
      %v1888 = vand.u32 %v1887, 4294901760
      %1889 = vmatpush1.msra.mxu0 %v1888
      %1890 = vmatprep.subr.mxu0 0.0
      %1891 = vmatpush1.msra.mxu0 0.0
      %1892 = vmatprep.subr.mxu0 0.0
      %1893 = vmatpush1.msra.mxu0 0.0
      %1894 = vmatprep.subr.mxu0 0.0
      %1895 = vmatpush1.msra.mxu0 0.0
      %1896 = vmatprep.subr.mxu0 0.0
      %1897 = vmatpush1.msra.mxu0 0.0
      %1898 = vmatprep.subr.mxu0 0.0
      %1899 = vmatpush1.msra.mxu0 0.0
      %1900 = vmatprep.subr.mxu0 0.0
      %1901 = vmatpush1.msra.mxu0 0.0
      %1902 = vmatprep.subr.mxu0 0.0
      %1903 = vmatpush1.msra.mxu0 0.0
      %1904 = vmatprep.subr.mxu0 0.0
      %1905 = vmatpush1.msra.mxu0 0.0
      %1906 = vmatprep.subr.mxu0 0.0
      %1907 = vmatpush1.msra.mxu0 0.0
      %1908 = vmatprep.subr.mxu0 0.0
      %1909 = vmatpush1.msra.mxu0 0.0
      %1910 = vmatprep.subr.mxu0 0.0
      %1911 = vmatpush1.msra.mxu0 0.0
      %1912 = vmatprep.subr.mxu0 0.0
      %1913 = vmatpush1.msra.mxu0 0.0
      %1914 = vmatprep.subr.mxu0 0.0
      %1915 = vmatpush1.msra.mxu0 0.0
      %1916 = vmatprep.subr.mxu0 0.0
      %1917 = vmatpush1.msra.mxu0 0.0
      %1918 = vmatprep.subr.mxu0 0.0
      %1919 = vmatpush1.msra.mxu0 0.0
      %1920 = vmatprep.subr.mxu0 0.0
      %1921 = vmatpush1.msra.mxu0 0.0
      %1922 = vmatprep.subr.mxu0 0.0
      %1923 = vmatpush1.msra.mxu0 0.0
      %1924 = vmatprep.subr.mxu0 0.0
      %1925 = vmatpush1.msra.mxu0 0.0
      %1926 = vmatprep.subr.mxu0 0.0
      %1927 = vmatpush1.msra.mxu0 0.0
      %1928 = vmatprep.subr.mxu0 0.0
      %1929 = vmatpush1.msra.mxu0 0.0
      %1930 = vmatprep.subr.mxu0 0.0
      %1931 = vmatpush1.msra.mxu0 0.0
      %1932 = vmatprep.subr.mxu0 0.0
      %1933 = vmatpush1.msra.mxu0 0.0
      %1934 = vmatprep.subr.mxu0 0.0
      %1935 = vmatpush1.msra.mxu0 0.0
      %1936 = vmatprep.subr.mxu0 0.0
      %1937 = vmatpush1.msra.mxu0 0.0
      %1938 = vmatprep.subr.mxu0 0.0
      %1939 = vmatpush1.msra.mxu0 0.0
      %1940 = vmatprep.subr.mxu0 0.0
      %1941 = vmatpush1.msra.mxu0 0.0
      %1942 = vmatprep.subr.mxu0 0.0
      %1943 = vmatpush1.msra.mxu0 0.0
      %1944 = vmatprep.subr.mxu0 0.0
      %1945 = vmatpush1.msra.mxu0 0.0
      %1946 = vmatprep.subr.mxu0 0.0
      %1947 = vmatpush1.msra.mxu0 0.0
      %1948 = vmatprep.subr.mxu0 0.0
      %1949 = vmatpush1.msra.mxu0 0.0
      %1950 = vmatprep.subr.mxu0 0.0
      %1951 = vmatpush1.msra.mxu0 0.0
      %1952 = vmatprep.mubr.f32.mxu0 0.0
      %v1953 = vand.u32 %v1583, 4294901760
      %1954 = vmatmul.mubr.f32.gmra.mrb[0].mxu0 %v1953
      %v1955 = vpop.f32.mrb[0].mxu0
      %v1956 = vadd.f32 %v1882, %v1955
      %v1957 = vpop.f32.mrb[0].mxu0
      %1958 = vdwg.mxu0
      %1959 = vmatprep.subr.mxu0 0.0
      %v1960 = vand.u32 %v1580, 4294901760
      %1961 = vmatpush1.msra.mxu0 %v1960
      %1962 = vmatprep.subr.mxu0 0.0
      %1963 = vmatpush1.msra.mxu0 0.0
      %1964 = vmatprep.subr.mxu0 0.0
      %1965 = vmatpush1.msra.mxu0 0.0
      %1966 = vmatprep.subr.mxu0 0.0
      %1967 = vmatpush1.msra.mxu0 0.0
      %1968 = vmatprep.subr.mxu0 0.0
      %1969 = vmatpush1.msra.mxu0 0.0
      %1970 = vmatprep.subr.mxu0 0.0
      %1971 = vmatpush1.msra.mxu0 0.0
      %1972 = vmatprep.subr.mxu0 0.0
      %1973 = vmatpush1.msra.mxu0 0.0
      %1974 = vmatprep.subr.mxu0 0.0
      %1975 = vmatpush1.msra.mxu0 0.0
      %1976 = vmatprep.subr.mxu0 0.0
      %1977 = vmatpush1.msra.mxu0 0.0
      %1978 = vmatprep.subr.mxu0 0.0
      %1979 = vmatpush1.msra.mxu0 0.0
      %1980 = vmatprep.subr.mxu0 0.0
      %1981 = vmatpush1.msra.mxu0 0.0
      %1982 = vmatprep.subr.mxu0 0.0
      %1983 = vmatpush1.msra.mxu0 0.0
      %1984 = vmatprep.subr.mxu0 0.0
      %1985 = vmatpush1.msra.mxu0 0.0
      %1986 = vmatprep.subr.mxu0 0.0
      %1987 = vmatpush1.msra.mxu0 0.0
      %1988 = vmatprep.subr.mxu0 0.0
      %1989 = vmatpush1.msra.mxu0 0.0
      %1990 = vmatprep.subr.mxu0 0.0
      %1991 = vmatpush1.msra.mxu0 0.0
      %1992 = vmatprep.subr.mxu0 0.0
      %1993 = vmatpush1.msra.mxu0 0.0
      %1994 = vmatprep.subr.mxu0 0.0
      %1995 = vmatpush1.msra.mxu0 0.0
      %1996 = vmatprep.subr.mxu0 0.0
      %1997 = vmatpush1.msra.mxu0 0.0
      %1998 = vmatprep.subr.mxu0 0.0
      %1999 = vmatpush1.msra.mxu0 0.0
      %2000 = vmatprep.subr.mxu0 0.0
      %2001 = vmatpush1.msra.mxu0 0.0
      %2002 = vmatprep.subr.mxu0 0.0
      %2003 = vmatpush1.msra.mxu0 0.0
      %2004 = vmatprep.subr.mxu0 0.0
      %2005 = vmatpush1.msra.mxu0 0.0
      %2006 = vmatprep.subr.mxu0 0.0
      %2007 = vmatpush1.msra.mxu0 0.0
      %2008 = vmatprep.subr.mxu0 0.0
      %2009 = vmatpush1.msra.mxu0 0.0
      %2010 = vmatprep.subr.mxu0 0.0
      %2011 = vmatpush1.msra.mxu0 0.0
      %2012 = vmatprep.subr.mxu0 0.0
      %2013 = vmatpush1.msra.mxu0 0.0
      %2014 = vmatprep.subr.mxu0 0.0
      %2015 = vmatpush1.msra.mxu0 0.0
      %2016 = vmatprep.subr.mxu0 0.0
      %2017 = vmatpush1.msra.mxu0 0.0
      %2018 = vmatprep.subr.mxu0 0.0
      %2019 = vmatpush1.msra.mxu0 0.0
      %2020 = vmatprep.subr.mxu0 0.0
      %2021 = vmatpush1.msra.mxu0 0.0
      %2022 = vmatprep.subr.mxu0 0.0
      %2023 = vmatpush1.msra.mxu0 0.0
      %2024 = vmatprep.mubr.f32.mxu0 0.0
      %v2025 = vand.u32 %v1583, 4294901760
      %2026 = vmatmul.mubr.f32.gmra.mrb[0].mxu0 %v2025
      %v2027 = vpop.f32.mrb[0].mxu0
      %v2028 = vadd.f32 %v1956, %v2027
      %v2029 = vpop.f32.mrb[0].mxu0
      %2030 = vdwg.mxu0
      %v2031 = vadd.f32 %v1573, %v2028
      %v2032 = vadd.f32 %v198, 1e-09
      %v2033 = vrcp.pop %v2032
      %v2034 = vmul.f32 %v2031, %v2033
      %2035 = vst [vmem:[%s184] sm:$0x1] %v2034
      %p2036 = scmp.lt.s32.totalorder %s18, 1
      %s2037 = scalar_select %p2036, %s18, 1
      %p2038 = scmp.lt.s32.totalorder %s17, 0
      %s2039 = scalar_select %p2038, %s17, 0
      %s2040 = sadd.s32 %s2039, %s2037
      %s2041 = scalar_lea.vmem %s2, %s2040
      // Predicated region
      $region29: #{edge_encoding.1} parent=27 // pred_check
        %p2042 = pneg %p99
      $region30: #{edge_encoding.1} parent=27 // pred_check_branch
        %2044 = sbr.rel (%p2042) target = $region32
      $region31: #{edge_encoding.1} parent=27 // pred_region
        _
      $region32: #{edge_encoding.1} parent=27 // pred_fallthru
        _
    $region28: #{edge_encoding.1} parent=5 // pred_fallthru
      _
    %p2045 = scmp.le.s32.totalorder 2, %s8
    // Predicated region
    $region33: #{edge_encoding.1} parent=5 // pred_check
      %p2046 = pneg %p2045
    $region34: #{edge_encoding.1} parent=5 // pred_check_branch
      %2048 = sbr.rel (%p2046) target = $region36
    $region35: #{edge_encoding.1} parent=5 // pred_region
      %s2049 = ssub.s32 %s8, 2
      // Predicated region
      $region37: #{edge_encoding.1} parent=35 // pred_check
        %p2050 = pneg %p105
      $region38: #{edge_encoding.1} parent=35 // pred_check_branch
        %2052 = sbr.rel (%p2050) target = $region40
      $region39: #{edge_encoding.1} parent=35 // pred_region
        %p2053 = scmp.lt.s32.totalorder %s20, 1
        %s2054 = scalar_select %p2053, %s20, 1
        %p2055 = scmp.lt.s32.totalorder %s19, 0
        %s2056 = scalar_select %p2055, %s19, 0
        %s2057 = sadd.s32 %s2056, %s2054
        %s2058 = scalar_lea.vmem %s2, %s2057
      $region40: #{edge_encoding.1} parent=35 // pred_fallthru
        _
    $region36: #{edge_encoding.1} parent=5 // pred_fallthru
      _
  $region6: #{edge_encoding.1} parent=0 // loop_footer
    %s12 = sadd.s32 1, %s8
  $region7: #{edge_encoding.1} parent=0 // loop_footer_branch
    %7 = sbr.rel target = $region3
  $region8: #{edge_encoding.1} parent=0 // loop_exit
    _

</llo_original>
